<compile_context>
chip_gen: v6e
topology: v6e:2x2x1
jax: 0.10.0
libtpu: 0.0.40
codegen_flags: <defaults>
</compile_context>

<pallas_src>
import functools

import jax
import jax.numpy as jnp
from jax.experimental import pallas as pl
from jax.experimental.pallas import tpu as pltpu


# ----------------------------------------------------------------------------
# Fused STGSALayer kernel: one grid step per batch tile.
# ----------------------------------------------------------------------------
def _stgsa_fused_kernel(x_ref, k_ref, w1a_ref, w1b_ref, w2a_ref, w2b_ref,
                        b1_ref, b2_ref, o_ref, *, n_layers, blocks_per_layer):
    # x_ref : (Bt, N*T, C)      input batch tile, natural (b, nt, c) layout
    # k_ref : (NB, N*T, N*T)    kron(Ahs, temp*Wtemp) per block (grid-invariant)
    # w*    : (NB, Bt*C, Bt*C)  block-diagonal sliced fea_emb weights
    # b*    : (NB, Bt*C, N*T)   biases pre-broadcast to full lane width
    # o_ref : (Bt, N*T, C)      output batch tile (running max over layers)
    bt, _, c = x_ref.shape

    # Boundary relayout folded into the kernel: per-batch (N*T, C) -> (C, N*T)
    # transposes go to the XLU; all downstream compute is lane-dense with the
    # N*T axis on the 128 lanes.
    cols = [jnp.transpose(x_ref[b].astype(jnp.float32), (1, 0)) for b in range(bt)]
    xt = cols[0] if bt == 1 else jnp.concatenate(cols, axis=0)        # (Bt*C, N*T)

    acc = None
    blk = 0
    for _li in range(n_layers):
        h = xt
        for _bi in range(blocks_per_layer):
            # spatial + temporal aggregation in ONE MXU matmul:
            #   spa[(b,c),(m,l)] = sum_{n,t} h[(b,c),(n,t)] * Ahs[n,m] * adapAt[t,l]
            k = k_ref[blk].astype(jnp.float32)
            spa = jnp.dot(h, k, preferred_element_type=jnp.float32)   # (Bt*C, N*T)

            # Gated feature embedding, concat-free / slice-free; the bias adds
            # are plain VPU adds (operands pre-broadcast in preprocessing).
            pre1 = (jnp.dot(w1a_ref[blk], spa, preferred_element_type=jnp.float32)
                    + jnp.dot(w1b_ref[blk], h, preferred_element_type=jnp.float32)
                    + b1_ref[blk])
            pre2 = (jnp.dot(w2a_ref[blk], spa, preferred_element_type=jnp.float32)
                    + jnp.dot(w2b_ref[blk], h, preferred_element_type=jnp.float32)
                    + b2_ref[blk])
            h = pre1 * jax.nn.sigmoid(pre2)
            blk += 1
        # torch.max over layer outputs, kept as a running max in registers.
        acc = h if acc is None else jnp.maximum(acc, h)

    # Fold the output relayout back: (C, N*T) -> (N*T, C) per batch element.
    for b in range(bt):
        o_ref[b] = jnp.transpose(acc[b * c:(b + 1) * c, :], (1, 0)).astype(o_ref.dtype)


# ----------------------------------------------------------------------------
# One-time setup: batch-tile choice + parameter preprocessing (hoisted out of
# the per-call jitted path).
# ----------------------------------------------------------------------------
def pick_batch_tile(batch, dim, target_rows=128):
    """Batch elements fused per grid step.

    Targets ~`target_rows` MXU rows (Bt*C) per matmul (use 256 on v6e/v7x for
    very large batches) while keeping >= 2 grid steps whenever the batch allows
    it, so both v7x TensorCores get work; on single-TC v5e/v6e the extra grid
    step only costs ~0.35us.
    """
    max_bt = max(1, target_rows // max(1, dim))
    divisors = [d for d in range(1, min(max_bt, batch) + 1) if batch % d == 0]
    two_step = [d for d in divisors if batch // d >= 2]
    return max(two_step) if two_step else max(divisors)


def preprocess_stgsa_params(temp, ahs, layer_params, *, batch_tile=1,
                            k_dtype=jnp.float32):
    """Run ONCE at setup; pass the returned arrays to `stgsa_layer_forward`.

    Folds temp*Wtemp and the spatial adjacency into K = kron(Ahs, temp*Wtemp),
    slices the gated-embedding weights into the four used quadrants (expanded
    block-diagonally for the batch tile), and pre-broadcasts the biases to full
    lane width.  Set k_dtype=jnp.bfloat16 at much larger N*T to halve K's
    DMA/VMEM cost (re-validate the output tolerance if you do).
    """
    temp = jnp.asarray(temp, jnp.float32)
    ahs = jnp.asarray(ahs, jnp.float32)
    T = temp.shape[0]
    N = ahs.shape[0]
    NT = N * T
    C = layer_params[0][0]["W1"].shape[0] // 2
    bt = batch_tile
    eye_bt = jnp.eye(bt, dtype=jnp.float32)

    ks, w1a, w1b, w2a, w2b, b1, b2 = [], [], [], [], [], [], []
    for blocks in layer_params:
        for p in blocks:
            adapAt = temp * p["Wtemp"]                               # (T, T)
            # K[(n,t),(m,l)] = Ahs[n,m] * adapAt[t,l]; the row-major (n*T+t)
            # flattening must stay in lockstep with X.reshape(B, N*T, C).
            ks.append(jnp.kron(ahs, adapAt))
            # Block-diagonal so a tile of Bt batch elements is one (Bt*C, N*T)
            # activation slab and every matmul has M = Bt*C rows.
            w1a.append(jnp.kron(eye_bt, p["W1"][:C, :C]))
            w1b.append(jnp.kron(eye_bt, p["W1"][:C, C:]))
            w2a.append(jnp.kron(eye_bt, p["W2"][C:, :C]))
            w2b.append(jnp.kron(eye_bt, p["W2"][C:, C:]))
            # Pre-broadcast biases to (Bt*C, N*T): plain vreg add in-kernel.
            b1.append(jnp.broadcast_to(jnp.tile(p["b1"][:C], bt)[:, None], (bt * C, NT)))
            b2.append(jnp.broadcast_to(jnp.tile(p["b2"][C:], bt)[:, None], (bt * C, NT)))

    return (jnp.stack(ks).astype(k_dtype),        # (nb, N*T, N*T)
            jnp.stack(w1a).astype(jnp.float32),   # (nb, Bt*C, Bt*C)
            jnp.stack(w1b).astype(jnp.float32),
            jnp.stack(w2a).astype(jnp.float32),
            jnp.stack(w2b).astype(jnp.float32),
            jnp.stack(b1).astype(jnp.float32),    # (nb, Bt*C, N*T)
            jnp.stack(b2).astype(jnp.float32))


# ----------------------------------------------------------------------------
# Jitted forward: only layout-free reshapes + one pallas_call.
# ----------------------------------------------------------------------------
def stgsa_layer_forward(X_bntc, k_stk, w1a, w1b, w2a, w2b, b1, b2, *,
                        n_layers, blocks_per_layer):
    """X_bntc: (B, N, T, C) ('bntc'); remaining args from preprocess_stgsa_params."""
    B, N, T, C = X_bntc.shape
    NT = N * T
    nb = k_stk.shape[0]
    assert nb == n_layers * blocks_per_layer
    btC = w1a.shape[1]
    bt = btC // C
    assert B % bt == 0, "batch must be divisible by the batch tile"

    x = X_bntc.reshape(B, NT, C)          # row-major compatible -> free

    kernel = functools.partial(_stgsa_fused_kernel,
                               n_layers=n_layers,
                               blocks_per_layer=blocks_per_layer)

    # TODO(synk): at much larger N*T, kron(Ahs, adapAt) (nb*(N*T)^2 f32, double
    # buffered) would exceed v7x's 64 MiB VMEM; switch to the factored
    # two-matmul form (Ahs then adapAt) or tile K over a reduction grid axis,
    # and single-buffer the grid-invariant params (pipeline_mode=pl.Buffered(1)).
    out = pl.pallas_call(
        kernel,
        out_shape=jax.ShapeDtypeStruct((B, NT, C), X_bntc.dtype),
        grid=(B // bt,),
        in_specs=[
            pl.BlockSpec((bt, NT, C), lambda i: (i, 0, 0)),       # x (natural layout)
            pl.BlockSpec((nb, NT, NT), lambda i: (0, 0, 0)),      # kron(Ahs, adapAt)
            pl.BlockSpec((nb, btC, btC), lambda i: (0, 0, 0)),    # W1[:C,:C] blocks
            pl.BlockSpec((nb, btC, btC), lambda i: (0, 0, 0)),    # W1[:C,C:]
            pl.BlockSpec((nb, btC, btC), lambda i: (0, 0, 0)),    # W2[C:,:C]
            pl.BlockSpec((nb, btC, btC), lambda i: (0, 0, 0)),    # W2[C:,C:]
            pl.BlockSpec((nb, btC, NT), lambda i: (0, 0, 0)),     # b1[:C] broadcast
            pl.BlockSpec((nb, btC, NT), lambda i: (0, 0, 0)),     # b2[C:] broadcast
        ],
        out_specs=pl.BlockSpec((bt, NT, C), lambda i: (i, 0, 0)),
        compiler_params=pltpu.CompilerParams(
            dimension_semantics=("parallel",),
            vmem_limit_bytes=32 * 1024 * 1024,
        ),
    )(x, k_stk, w1a, w1b, w2a, w2b, b1, b2)

    return out.reshape(B, N, T, C)        # row-major compatible -> free


# ----------------------------------------------------------------------------
# Pure-JAX reference (mirrors the PyTorch code exactly).
# ----------------------------------------------------------------------------
def _block_ref(x_bntc, temp, ahs, p, dim):
    adapAt = temp * p["Wtemp"]
    spa = jnp.einsum("bntc,nm->bmtc", x_bntc, ahs)
    spa_tem = jnp.einsum("bmtc,tl->bmlc", spa, adapAt)
    h = jnp.concatenate([spa_tem, x_bntc], axis=-1)
    st1 = (h @ p["W1"].T + p["b1"])[..., :dim]
    st2 = jax.nn.sigmoid(h @ p["W2"].T + p["b2"])[..., dim:]
    return st1 * st2


def _layer_ref(X, temp, ahs, layer_params, dim):
    outs = []
    for blocks in layer_params:
        h = X
        for p in blocks:
            h = _block_ref(h, temp, ahs, p, dim)
        outs.append(h)
    return jnp.max(jnp.stack(outs, axis=-1), axis=-1)


# ----------------------------------------------------------------------------
def _init_block_params(key, T, C):
    ks = jax.random.split(key, 5)
    return {
        "Wtemp": jax.random.uniform(ks[0], (T, T), jnp.float32),
        "W1": 0.1 * jax.random.normal(ks[1], (2 * C, 2 * C), jnp.float32),
        "b1": 0.1 * jax.random.normal(ks[2], (2 * C,), jnp.float32),
        "W2": 0.1 * jax.random.normal(ks[3], (2 * C, 2 * C), jnp.float32),
        "b2": 0.1 * jax.random.normal(ks[4], (2 * C,), jnp.float32),
    }


if __name__ == "__main__":
    # Small, module-consistent shapes:
    #   batch=2, nodes=16, history=8, dim=16, layers_per_model=2, block_per_layers=2
    B, N, T, C = 2, 16, 8, 16
    layers_per_model, block_per_layers = 2, 2

    key = jax.random.PRNGKey(0)
    k_x, k_temp, k_a, k_params = jax.random.split(key, 4)

    X = jax.random.normal(k_x, (B, N, T, C), jnp.float32)          # 'bntc'
    temp = jax.random.uniform(k_temp, (T, T), jnp.float32)
    Ahs = jax.random.uniform(k_a, (N, N), jnp.float32) / N         # adjacency

    block_keys = jax.random.split(k_params, layers_per_model * block_per_layers)
    params = [
        [_init_block_params(block_keys[li * block_per_layers + bi], T, C)
         for bi in range(block_per_layers)]
        for li in range(layers_per_model)
    ]

    # --- one-time setup, hoisted out of the per-call path --------------------
    bt = pick_batch_tile(B, C)                       # -> 1 here, grid=(2,)
    packed = preprocess_stgsa_params(temp, Ahs, params, batch_tile=bt)
    packed = jax.block_until_ready(packed)           # materialize params once

    fwd = jax.jit(functools.partial(
        stgsa_layer_forward,
        n_layers=layers_per_model, blocks_per_layer=block_per_layers))

    out = jax.block_until_ready(fwd(X, *packed))

    ref = _layer_ref(X, temp, Ahs, params, C)
    assert out.shape == ref.shape == (B, N, T, C), (out.shape, ref.shape)
    max_diff = float(jnp.max(jnp.abs(out - ref)))
    assert max_diff < 1e-3, f"mismatch vs reference: max|diff|={max_diff}"

    print("KERNEL_OK")
</pallas_src>

<mosaic_0001>
module attributes {stable_mosaic.version = 11 : i64} {
  func.func @_stgsa_fused_kernel(%arg0: i32, %arg1: memref<1x128x16xf32, #tpu.memory_space<vmem>>, %arg2: memref<4x128x128xf32, #tpu.memory_space<vmem>>, %arg3: memref<4x16x16xf32, #tpu.memory_space<vmem>>, %arg4: memref<4x16x16xf32, #tpu.memory_space<vmem>>, %arg5: memref<4x16x16xf32, #tpu.memory_space<vmem>>, %arg6: memref<4x16x16xf32, #tpu.memory_space<vmem>>, %arg7: memref<4x16x128xf32, #tpu.memory_space<vmem>>, %arg8: memref<4x16x128xf32, #tpu.memory_space<vmem>>, %arg9: memref<1x128x16xf32, #tpu.memory_space<vmem>>) attributes {dimension_semantics = [#tpu.dimension_semantics<parallel>], iteration_bounds = array<i64: 2>, scalar_prefetch = 0 : i64, scratch_operands = 0 : i64, tpu.core_type = #tpu.core_type<tc>, window_params = [{transform_indices = @transform_0, window_bounds = array<i64: 1, 128, 16>}, {pipeline_mode = #tpu.pipeline_mode<synchronous>, transform_indices = @transform_1, window_bounds = array<i64: 4, 128, 128>}, {pipeline_mode = #tpu.pipeline_mode<synchronous>, transform_indices = @transform_2, window_bounds = array<i64: 4, 16, 16>}, {pipeline_mode = #tpu.pipeline_mode<synchronous>, transform_indices = @transform_3, window_bounds = array<i64: 4, 16, 16>}, {pipeline_mode = #tpu.pipeline_mode<synchronous>, transform_indices = @transform_4, window_bounds = array<i64: 4, 16, 16>}, {pipeline_mode = #tpu.pipeline_mode<synchronous>, transform_indices = @transform_5, window_bounds = array<i64: 4, 16, 16>}, {pipeline_mode = #tpu.pipeline_mode<synchronous>, transform_indices = @transform_6, window_bounds = array<i64: 4, 16, 128>}, {pipeline_mode = #tpu.pipeline_mode<synchronous>, transform_indices = @transform_7, window_bounds = array<i64: 4, 16, 128>}, {transform_indices = @transform_8, window_bounds = array<i64: 1, 128, 16>}]} {
    %c0 = arith.constant 0 : index
    %c0_0 = arith.constant 0 : index
    %c0_1 = arith.constant 0 : index
    %0 = vector.load %arg1[%c0, %c0_0, %c0_1] : memref<1x128x16xf32, #tpu.memory_space<vmem>>, vector<1x128x16xf32>
    %1 = vector.shape_cast %0 : vector<1x128x16xf32> to vector<128x16xf32>
    %2 = tpu.transpose %1, [1, 0] : vector<128x16xf32> -> vector<16x128xf32>
    %c0_2 = arith.constant 0 : index
    %c0_3 = arith.constant 0 : index
    %c0_4 = arith.constant 0 : index
    %3 = vector.load %arg2[%c0_2, %c0_3, %c0_4] : memref<4x128x128xf32, #tpu.memory_space<vmem>>, vector<1x128x128xf32>
    %4 = vector.shape_cast %3 : vector<1x128x128xf32> to vector<128x128xf32>
    %cst = arith.constant dense<0.000000e+00> : vector<16x128xf32>
    %5 = tpu.matmul %2, %4, %cst {dimension_numbers = #tpu.dot_dimension_numbers<[1], [0], [0], [1], [0, 0, 1, 1], [], []>} : vector<16x128xf32>, vector<128x128xf32>, vector<16x128xf32> -> vector<16x128xf32>
    %c0_5 = arith.constant 0 : index
    %c0_6 = arith.constant 0 : index
    %c0_7 = arith.constant 0 : index
    %6 = vector.load %arg3[%c0_5, %c0_6, %c0_7] : memref<4x16x16xf32, #tpu.memory_space<vmem>>, vector<1x16x16xf32>
    %7 = vector.shape_cast %6 : vector<1x16x16xf32> to vector<16x16xf32>
    %cst_8 = arith.constant dense<0.000000e+00> : vector<16x128xf32>
    %8 = tpu.matmul %7, %5, %cst_8 {dimension_numbers = #tpu.dot_dimension_numbers<[1], [0], [0], [1], [0, 0, 1, 1], [], []>} : vector<16x16xf32>, vector<16x128xf32>, vector<16x128xf32> -> vector<16x128xf32>
    %c0_9 = arith.constant 0 : index
    %c0_10 = arith.constant 0 : index
    %c0_11 = arith.constant 0 : index
    %9 = vector.load %arg4[%c0_9, %c0_10, %c0_11] : memref<4x16x16xf32, #tpu.memory_space<vmem>>, vector<1x16x16xf32>
    %10 = vector.shape_cast %9 : vector<1x16x16xf32> to vector<16x16xf32>
    %cst_12 = arith.constant dense<0.000000e+00> : vector<16x128xf32>
    %11 = tpu.matmul %10, %2, %cst_12 {dimension_numbers = #tpu.dot_dimension_numbers<[1], [0], [0], [1], [0, 0, 1, 1], [], []>} : vector<16x16xf32>, vector<16x128xf32>, vector<16x128xf32> -> vector<16x128xf32>
    %12 = arith.addf %8, %11 : vector<16x128xf32>
    %c0_13 = arith.constant 0 : index
    %c0_14 = arith.constant 0 : index
    %c0_15 = arith.constant 0 : index
    %13 = vector.load %arg7[%c0_13, %c0_14, %c0_15] : memref<4x16x128xf32, #tpu.memory_space<vmem>>, vector<1x16x128xf32>
    %14 = vector.shape_cast %13 : vector<1x16x128xf32> to vector<16x128xf32>
    %15 = arith.addf %12, %14 : vector<16x128xf32>
    %c0_16 = arith.constant 0 : index
    %c0_17 = arith.constant 0 : index
    %c0_18 = arith.constant 0 : index
    %16 = vector.load %arg5[%c0_16, %c0_17, %c0_18] : memref<4x16x16xf32, #tpu.memory_space<vmem>>, vector<1x16x16xf32>
    %17 = vector.shape_cast %16 : vector<1x16x16xf32> to vector<16x16xf32>
    %cst_19 = arith.constant dense<0.000000e+00> : vector<16x128xf32>
    %18 = tpu.matmul %17, %5, %cst_19 {dimension_numbers = #tpu.dot_dimension_numbers<[1], [0], [0], [1], [0, 0, 1, 1], [], []>} : vector<16x16xf32>, vector<16x128xf32>, vector<16x128xf32> -> vector<16x128xf32>
    %c0_20 = arith.constant 0 : index
    %c0_21 = arith.constant 0 : index
    %c0_22 = arith.constant 0 : index
    %19 = vector.load %arg6[%c0_20, %c0_21, %c0_22] : memref<4x16x16xf32, #tpu.memory_space<vmem>>, vector<1x16x16xf32>
    %20 = vector.shape_cast %19 : vector<1x16x16xf32> to vector<16x16xf32>
    %cst_23 = arith.constant dense<0.000000e+00> : vector<16x128xf32>
    %21 = tpu.matmul %20, %2, %cst_23 {dimension_numbers = #tpu.dot_dimension_numbers<[1], [0], [0], [1], [0, 0, 1, 1], [], []>} : vector<16x16xf32>, vector<16x128xf32>, vector<16x128xf32> -> vector<16x128xf32>
    %22 = arith.addf %18, %21 : vector<16x128xf32>
    %c0_24 = arith.constant 0 : index
    %c0_25 = arith.constant 0 : index
    %c0_26 = arith.constant 0 : index
    %23 = vector.load %arg8[%c0_24, %c0_25, %c0_26] : memref<4x16x128xf32, #tpu.memory_space<vmem>>, vector<1x16x128xf32>
    %24 = vector.shape_cast %23 : vector<1x16x128xf32> to vector<16x128xf32>
    %25 = arith.addf %22, %24 : vector<16x128xf32>
    %26 = arith.negf %25 : vector<16x128xf32>
    %27 = math.exp %26 : vector<16x128xf32>
    %cst_27 = arith.constant 1.000000e+00 : f32
    %28 = vector.broadcast %cst_27 : f32 to vector<16x128xf32>
    %29 = arith.addf %28, %27 : vector<16x128xf32>
    %30 = arith.divf %28, %29 : vector<16x128xf32>
    %31 = arith.mulf %15, %30 : vector<16x128xf32>
    %c1 = arith.constant 1 : index
    %c0_28 = arith.constant 0 : index
    %c0_29 = arith.constant 0 : index
    %32 = vector.load %arg2[%c1, %c0_28, %c0_29] : memref<4x128x128xf32, #tpu.memory_space<vmem>>, vector<1x128x128xf32>
    %33 = vector.shape_cast %32 : vector<1x128x128xf32> to vector<128x128xf32>
    %cst_30 = arith.constant dense<0.000000e+00> : vector<16x128xf32>
    %34 = tpu.matmul %31, %33, %cst_30 {dimension_numbers = #tpu.dot_dimension_numbers<[1], [0], [0], [1], [0, 0, 1, 1], [], []>} : vector<16x128xf32>, vector<128x128xf32>, vector<16x128xf32> -> vector<16x128xf32>
    %c1_31 = arith.constant 1 : index
    %c0_32 = arith.constant 0 : index
    %c0_33 = arith.constant 0 : index
    %35 = vector.load %arg3[%c1_31, %c0_32, %c0_33] : memref<4x16x16xf32, #tpu.memory_space<vmem>>, vector<1x16x16xf32>
    %36 = vector.shape_cast %35 : vector<1x16x16xf32> to vector<16x16xf32>
    %cst_34 = arith.constant dense<0.000000e+00> : vector<16x128xf32>
    %37 = tpu.matmul %36, %34, %cst_34 {dimension_numbers = #tpu.dot_dimension_numbers<[1], [0], [0], [1], [0, 0, 1, 1], [], []>} : vector<16x16xf32>, vector<16x128xf32>, vector<16x128xf32> -> vector<16x128xf32>
    %c1_35 = arith.constant 1 : index
    %c0_36 = arith.constant 0 : index
    %c0_37 = arith.constant 0 : index
    %38 = vector.load %arg4[%c1_35, %c0_36, %c0_37] : memref<4x16x16xf32, #tpu.memory_space<vmem>>, vector<1x16x16xf32>
    %39 = vector.shape_cast %38 : vector<1x16x16xf32> to vector<16x16xf32>
    %cst_38 = arith.constant dense<0.000000e+00> : vector<16x128xf32>
    %40 = tpu.matmul %39, %31, %cst_38 {dimension_numbers = #tpu.dot_dimension_numbers<[1], [0], [0], [1], [0, 0, 1, 1], [], []>} : vector<16x16xf32>, vector<16x128xf32>, vector<16x128xf32> -> vector<16x128xf32>
    %41 = arith.addf %37, %40 : vector<16x128xf32>
    %c1_39 = arith.constant 1 : index
    %c0_40 = arith.constant 0 : index
    %c0_41 = arith.constant 0 : index
    %42 = vector.load %arg7[%c1_39, %c0_40, %c0_41] : memref<4x16x128xf32, #tpu.memory_space<vmem>>, vector<1x16x128xf32>
    %43 = vector.shape_cast %42 : vector<1x16x128xf32> to vector<16x128xf32>
    %44 = arith.addf %41, %43 : vector<16x128xf32>
    %c1_42 = arith.constant 1 : index
    %c0_43 = arith.constant 0 : index
    %c0_44 = arith.constant 0 : index
    %45 = vector.load %arg5[%c1_42, %c0_43, %c0_44] : memref<4x16x16xf32, #tpu.memory_space<vmem>>, vector<1x16x16xf32>
    %46 = vector.shape_cast %45 : vector<1x16x16xf32> to vector<16x16xf32>
    %cst_45 = arith.constant dense<0.000000e+00> : vector<16x128xf32>
    %47 = tpu.matmul %46, %34, %cst_45 {dimension_numbers = #tpu.dot_dimension_numbers<[1], [0], [0], [1], [0, 0, 1, 1], [], []>} : vector<16x16xf32>, vector<16x128xf32>, vector<16x128xf32> -> vector<16x128xf32>
    %c1_46 = arith.constant 1 : index
    %c0_47 = arith.constant 0 : index
    %c0_48 = arith.constant 0 : index
    %48 = vector.load %arg6[%c1_46, %c0_47, %c0_48] : memref<4x16x16xf32, #tpu.memory_space<vmem>>, vector<1x16x16xf32>
    %49 = vector.shape_cast %48 : vector<1x16x16xf32> to vector<16x16xf32>
    %cst_49 = arith.constant dense<0.000000e+00> : vector<16x128xf32>
    %50 = tpu.matmul %49, %31, %cst_49 {dimension_numbers = #tpu.dot_dimension_numbers<[1], [0], [0], [1], [0, 0, 1, 1], [], []>} : vector<16x16xf32>, vector<16x128xf32>, vector<16x128xf32> -> vector<16x128xf32>
    %51 = arith.addf %47, %50 : vector<16x128xf32>
    %c1_50 = arith.constant 1 : index
    %c0_51 = arith.constant 0 : index
    %c0_52 = arith.constant 0 : index
    %52 = vector.load %arg8[%c1_50, %c0_51, %c0_52] : memref<4x16x128xf32, #tpu.memory_space<vmem>>, vector<1x16x128xf32>
    %53 = vector.shape_cast %52 : vector<1x16x128xf32> to vector<16x128xf32>
    %54 = arith.addf %51, %53 : vector<16x128xf32>
    %55 = arith.negf %54 : vector<16x128xf32>
    %56 = math.exp %55 : vector<16x128xf32>
    %cst_53 = arith.constant 1.000000e+00 : f32
    %57 = vector.broadcast %cst_53 : f32 to vector<16x128xf32>
    %58 = arith.addf %57, %56 : vector<16x128xf32>
    %59 = arith.divf %57, %58 : vector<16x128xf32>
    %60 = arith.mulf %44, %59 : vector<16x128xf32>
    %c2 = arith.constant 2 : index
    %c0_54 = arith.constant 0 : index
    %c0_55 = arith.constant 0 : index
    %61 = vector.load %arg2[%c2, %c0_54, %c0_55] : memref<4x128x128xf32, #tpu.memory_space<vmem>>, vector<1x128x128xf32>
    %62 = vector.shape_cast %61 : vector<1x128x128xf32> to vector<128x128xf32>
    %cst_56 = arith.constant dense<0.000000e+00> : vector<16x128xf32>
    %63 = tpu.matmul %2, %62, %cst_56 {dimension_numbers = #tpu.dot_dimension_numbers<[1], [0], [0], [1], [0, 0, 1, 1], [], []>} : vector<16x128xf32>, vector<128x128xf32>, vector<16x128xf32> -> vector<16x128xf32>
    %c2_57 = arith.constant 2 : index
    %c0_58 = arith.constant 0 : index
    %c0_59 = arith.constant 0 : index
    %64 = vector.load %arg3[%c2_57, %c0_58, %c0_59] : memref<4x16x16xf32, #tpu.memory_space<vmem>>, vector<1x16x16xf32>
    %65 = vector.shape_cast %64 : vector<1x16x16xf32> to vector<16x16xf32>
    %cst_60 = arith.constant dense<0.000000e+00> : vector<16x128xf32>
    %66 = tpu.matmul %65, %63, %cst_60 {dimension_numbers = #tpu.dot_dimension_numbers<[1], [0], [0], [1], [0, 0, 1, 1], [], []>} : vector<16x16xf32>, vector<16x128xf32>, vector<16x128xf32> -> vector<16x128xf32>
    %c2_61 = arith.constant 2 : index
    %c0_62 = arith.constant 0 : index
    %c0_63 = arith.constant 0 : index
    %67 = vector.load %arg4[%c2_61, %c0_62, %c0_63] : memref<4x16x16xf32, #tpu.memory_space<vmem>>, vector<1x16x16xf32>
    %68 = vector.shape_cast %67 : vector<1x16x16xf32> to vector<16x16xf32>
    %cst_64 = arith.constant dense<0.000000e+00> : vector<16x128xf32>
    %69 = tpu.matmul %68, %2, %cst_64 {dimension_numbers = #tpu.dot_dimension_numbers<[1], [0], [0], [1], [0, 0, 1, 1], [], []>} : vector<16x16xf32>, vector<16x128xf32>, vector<16x128xf32> -> vector<16x128xf32>
    %70 = arith.addf %66, %69 : vector<16x128xf32>
    %c2_65 = arith.constant 2 : index
    %c0_66 = arith.constant 0 : index
    %c0_67 = arith.constant 0 : index
    %71 = vector.load %arg7[%c2_65, %c0_66, %c0_67] : memref<4x16x128xf32, #tpu.memory_space<vmem>>, vector<1x16x128xf32>
    %72 = vector.shape_cast %71 : vector<1x16x128xf32> to vector<16x128xf32>
    %73 = arith.addf %70, %72 : vector<16x128xf32>
    %c2_68 = arith.constant 2 : index
    %c0_69 = arith.constant 0 : index
    %c0_70 = arith.constant 0 : index
    %74 = vector.load %arg5[%c2_68, %c0_69, %c0_70] : memref<4x16x16xf32, #tpu.memory_space<vmem>>, vector<1x16x16xf32>
    %75 = vector.shape_cast %74 : vector<1x16x16xf32> to vector<16x16xf32>
    %cst_71 = arith.constant dense<0.000000e+00> : vector<16x128xf32>
    %76 = tpu.matmul %75, %63, %cst_71 {dimension_numbers = #tpu.dot_dimension_numbers<[1], [0], [0], [1], [0, 0, 1, 1], [], []>} : vector<16x16xf32>, vector<16x128xf32>, vector<16x128xf32> -> vector<16x128xf32>
    %c2_72 = arith.constant 2 : index
    %c0_73 = arith.constant 0 : index
    %c0_74 = arith.constant 0 : index
    %77 = vector.load %arg6[%c2_72, %c0_73, %c0_74] : memref<4x16x16xf32, #tpu.memory_space<vmem>>, vector<1x16x16xf32>
    %78 = vector.shape_cast %77 : vector<1x16x16xf32> to vector<16x16xf32>
    %cst_75 = arith.constant dense<0.000000e+00> : vector<16x128xf32>
    %79 = tpu.matmul %78, %2, %cst_75 {dimension_numbers = #tpu.dot_dimension_numbers<[1], [0], [0], [1], [0, 0, 1, 1], [], []>} : vector<16x16xf32>, vector<16x128xf32>, vector<16x128xf32> -> vector<16x128xf32>
    %80 = arith.addf %76, %79 : vector<16x128xf32>
    %c2_76 = arith.constant 2 : index
    %c0_77 = arith.constant 0 : index
    %c0_78 = arith.constant 0 : index
    %81 = vector.load %arg8[%c2_76, %c0_77, %c0_78] : memref<4x16x128xf32, #tpu.memory_space<vmem>>, vector<1x16x128xf32>
    %82 = vector.shape_cast %81 : vector<1x16x128xf32> to vector<16x128xf32>
    %83 = arith.addf %80, %82 : vector<16x128xf32>
    %84 = arith.negf %83 : vector<16x128xf32>
    %85 = math.exp %84 : vector<16x128xf32>
    %cst_79 = arith.constant 1.000000e+00 : f32
    %86 = vector.broadcast %cst_79 : f32 to vector<16x128xf32>
    %87 = arith.addf %86, %85 : vector<16x128xf32>
    %88 = arith.divf %86, %87 : vector<16x128xf32>
    %89 = arith.mulf %73, %88 : vector<16x128xf32>
    %c3 = arith.constant 3 : index
    %c0_80 = arith.constant 0 : index
    %c0_81 = arith.constant 0 : index
    %90 = vector.load %arg2[%c3, %c0_80, %c0_81] : memref<4x128x128xf32, #tpu.memory_space<vmem>>, vector<1x128x128xf32>
    %91 = vector.shape_cast %90 : vector<1x128x128xf32> to vector<128x128xf32>
    %cst_82 = arith.constant dense<0.000000e+00> : vector<16x128xf32>
    %92 = tpu.matmul %89, %91, %cst_82 {dimension_numbers = #tpu.dot_dimension_numbers<[1], [0], [0], [1], [0, 0, 1, 1], [], []>} : vector<16x128xf32>, vector<128x128xf32>, vector<16x128xf32> -> vector<16x128xf32>
    %c3_83 = arith.constant 3 : index
    %c0_84 = arith.constant 0 : index
    %c0_85 = arith.constant 0 : index
    %93 = vector.load %arg3[%c3_83, %c0_84, %c0_85] : memref<4x16x16xf32, #tpu.memory_space<vmem>>, vector<1x16x16xf32>
    %94 = vector.shape_cast %93 : vector<1x16x16xf32> to vector<16x16xf32>
    %cst_86 = arith.constant dense<0.000000e+00> : vector<16x128xf32>
    %95 = tpu.matmul %94, %92, %cst_86 {dimension_numbers = #tpu.dot_dimension_numbers<[1], [0], [0], [1], [0, 0, 1, 1], [], []>} : vector<16x16xf32>, vector<16x128xf32>, vector<16x128xf32> -> vector<16x128xf32>
    %c3_87 = arith.constant 3 : index
    %c0_88 = arith.constant 0 : index
    %c0_89 = arith.constant 0 : index
    %96 = vector.load %arg4[%c3_87, %c0_88, %c0_89] : memref<4x16x16xf32, #tpu.memory_space<vmem>>, vector<1x16x16xf32>
    %97 = vector.shape_cast %96 : vector<1x16x16xf32> to vector<16x16xf32>
    %cst_90 = arith.constant dense<0.000000e+00> : vector<16x128xf32>
    %98 = tpu.matmul %97, %89, %cst_90 {dimension_numbers = #tpu.dot_dimension_numbers<[1], [0], [0], [1], [0, 0, 1, 1], [], []>} : vector<16x16xf32>, vector<16x128xf32>, vector<16x128xf32> -> vector<16x128xf32>
    %99 = arith.addf %95, %98 : vector<16x128xf32>
    %c3_91 = arith.constant 3 : index
    %c0_92 = arith.constant 0 : index
    %c0_93 = arith.constant 0 : index
    %100 = vector.load %arg7[%c3_91, %c0_92, %c0_93] : memref<4x16x128xf32, #tpu.memory_space<vmem>>, vector<1x16x128xf32>
    %101 = vector.shape_cast %100 : vector<1x16x128xf32> to vector<16x128xf32>
    %102 = arith.addf %99, %101 : vector<16x128xf32>
    %c3_94 = arith.constant 3 : index
    %c0_95 = arith.constant 0 : index
    %c0_96 = arith.constant 0 : index
    %103 = vector.load %arg5[%c3_94, %c0_95, %c0_96] : memref<4x16x16xf32, #tpu.memory_space<vmem>>, vector<1x16x16xf32>
    %104 = vector.shape_cast %103 : vector<1x16x16xf32> to vector<16x16xf32>
    %cst_97 = arith.constant dense<0.000000e+00> : vector<16x128xf32>
    %105 = tpu.matmul %104, %92, %cst_97 {dimension_numbers = #tpu.dot_dimension_numbers<[1], [0], [0], [1], [0, 0, 1, 1], [], []>} : vector<16x16xf32>, vector<16x128xf32>, vector<16x128xf32> -> vector<16x128xf32>
    %c3_98 = arith.constant 3 : index
    %c0_99 = arith.constant 0 : index
    %c0_100 = arith.constant 0 : index
    %106 = vector.load %arg6[%c3_98, %c0_99, %c0_100] : memref<4x16x16xf32, #tpu.memory_space<vmem>>, vector<1x16x16xf32>
    %107 = vector.shape_cast %106 : vector<1x16x16xf32> to vector<16x16xf32>
    %cst_101 = arith.constant dense<0.000000e+00> : vector<16x128xf32>
    %108 = tpu.matmul %107, %89, %cst_101 {dimension_numbers = #tpu.dot_dimension_numbers<[1], [0], [0], [1], [0, 0, 1, 1], [], []>} : vector<16x16xf32>, vector<16x128xf32>, vector<16x128xf32> -> vector<16x128xf32>
    %109 = arith.addf %105, %108 : vector<16x128xf32>
    %c3_102 = arith.constant 3 : index
    %c0_103 = arith.constant 0 : index
    %c0_104 = arith.constant 0 : index
    %110 = vector.load %arg8[%c3_102, %c0_103, %c0_104] : memref<4x16x128xf32, #tpu.memory_space<vmem>>, vector<1x16x128xf32>
    %111 = vector.shape_cast %110 : vector<1x16x128xf32> to vector<16x128xf32>
    %112 = arith.addf %109, %111 : vector<16x128xf32>
    %113 = arith.negf %112 : vector<16x128xf32>
    %114 = math.exp %113 : vector<16x128xf32>
    %cst_105 = arith.constant 1.000000e+00 : f32
    %115 = vector.broadcast %cst_105 : f32 to vector<16x128xf32>
    %116 = arith.addf %115, %114 : vector<16x128xf32>
    %117 = arith.divf %115, %116 : vector<16x128xf32>
    %118 = arith.mulf %102, %117 : vector<16x128xf32>
    %119 = arith.maximumf %60, %118 : vector<16x128xf32>
    %120 = tpu.transpose %119, [1, 0] : vector<16x128xf32> -> vector<128x16xf32>
    %c0_106 = arith.constant 0 : index
    %c0_107 = arith.constant 0 : index
    %c0_108 = arith.constant 0 : index
    %121 = vector.load %arg9[%c0_106, %c0_107, %c0_108] : memref<1x128x16xf32, #tpu.memory_space<vmem>>, vector<1x128x16xf32>
    %122 = vector.shape_cast %121 : vector<1x128x16xf32> to vector<128x16xf32>
    %123 = vector.shape_cast %120 : vector<128x16xf32> to vector<1x128x16xf32>
    tpu.vector_store %arg9[%c0_106, %c0_107, %c0_108], %123 {strides = array<i32>} : memref<1x128x16xf32, #tpu.memory_space<vmem>>, vector<1x128x16xf32>,
    return
  }
  func.func @transform_0(%arg0: i32) -> (i32, i32, i32) {
    %c0_i32 = arith.constant 0 : i32
    %c0_i32_0 = arith.constant 0 : i32
    %c0_i32_1 = arith.constant 0 : i32
    return %arg0, %c0_i32, %c0_i32_0 : i32, i32, i32
  }
  func.func @transform_1(%arg0: i32) -> (i32, i32, i32) {
    %c0_i32 = arith.constant 0 : i32
    %c0_i32_0 = arith.constant 0 : i32
    %c0_i32_1 = arith.constant 0 : i32
    %c0_i32_2 = arith.constant 0 : i32
    return %c0_i32, %c0_i32_0, %c0_i32_1 : i32, i32, i32
  }
  func.func @transform_2(%arg0: i32) -> (i32, i32, i32) {
    %c0_i32 = arith.constant 0 : i32
    %c0_i32_0 = arith.constant 0 : i32
    %c0_i32_1 = arith.constant 0 : i32
    %c0_i32_2 = arith.constant 0 : i32
    return %c0_i32, %c0_i32_0, %c0_i32_1 : i32, i32, i32
  }
  func.func @transform_3(%arg0: i32) -> (i32, i32, i32) {
    %c0_i32 = arith.constant 0 : i32
    %c0_i32_0 = arith.constant 0 : i32
    %c0_i32_1 = arith.constant 0 : i32
    %c0_i32_2 = arith.constant 0 : i32
    return %c0_i32, %c0_i32_0, %c0_i32_1 : i32, i32, i32
  }
  func.func @transform_4(%arg0: i32) -> (i32, i32, i32) {
    %c0_i32 = arith.constant 0 : i32
    %c0_i32_0 = arith.constant 0 : i32
    %c0_i32_1 = arith.constant 0 : i32
    %c0_i32_2 = arith.constant 0 : i32
    return %c0_i32, %c0_i32_0, %c0_i32_1 : i32, i32, i32
  }
  func.func @transform_5(%arg0: i32) -> (i32, i32, i32) {
    %c0_i32 = arith.constant 0 : i32
    %c0_i32_0 = arith.constant 0 : i32
    %c0_i32_1 = arith.constant 0 : i32
    %c0_i32_2 = arith.constant 0 : i32
    return %c0_i32, %c0_i32_0, %c0_i32_1 : i32, i32, i32
  }
  func.func @transform_6(%arg0: i32) -> (i32, i32, i32) {
    %c0_i32 = arith.constant 0 : i32
    %c0_i32_0 = arith.constant 0 : i32
    %c0_i32_1 = arith.constant 0 : i32
    %c0_i32_2 = arith.constant 0 : i32
    return %c0_i32, %c0_i32_0, %c0_i32_1 : i32, i32, i32
  }
  func.func @transform_7(%arg0: i32) -> (i32, i32, i32) {
    %c0_i32 = arith.constant 0 : i32
    %c0_i32_0 = arith.constant 0 : i32
    %c0_i32_1 = arith.constant 0 : i32
    %c0_i32_2 = arith.constant 0 : i32
    return %c0_i32, %c0_i32_0, %c0_i32_1 : i32, i32, i32
  }
  func.func @transform_8(%arg0: i32) -> (i32, i32, i32) {
    %c0_i32 = arith.constant 0 : i32
    %c0_i32_0 = arith.constant 0 : i32
    %c0_i32_1 = arith.constant 0 : i32
    return %arg0, %c0_i32, %c0_i32_0 : i32, i32, i32
  }
}

</mosaic_0001>

<llo_original>
// kernel: stgsa_layer_forward.1
$region0: #{stgsa_layer_forward.1}
  #allocation0 [shape = 'u32[]', space=smem, size = 0x4, offset = 0x4, fixed_abs, tag = 'smem constant byte address 0x4 - core index']
  #allocation1 [shape = 'u32[144,128]{1,0:T(1,128)}', space=vmem, size = 0x12000, scoped, tag = 'internal scratch']
  %s0 = inlined_call_operand.hbm [shape: f32[2,128,16], index: 0, kind: input, shape index: {}]
  %s1 = inlined_call_operand.hbm [shape: f32[4,128,128], index: 1, kind: input, shape index: {}]
  %s2 = inlined_call_operand.hbm [shape: f32[4,16,16], index: 2, kind: input, shape index: {}]
  %s3 = inlined_call_operand.hbm [shape: f32[4,16,16], index: 3, kind: input, shape index: {}]
  %s4 = inlined_call_operand.hbm [shape: f32[4,16,16], index: 4, kind: input, shape index: {}]
  %s5 = inlined_call_operand.hbm [shape: f32[4,16,16], index: 5, kind: input, shape index: {}]
  %s6 = inlined_call_operand.hbm [shape: f32[4,16,128], index: 6, kind: input, shape index: {}]
  %s7 = inlined_call_operand.hbm [shape: f32[4,16,128], index: 7, kind: input, shape index: {}]
  %s8 = inlined_call_operand.hbm [shape: f32[2,128,16], index: 8, kind: output, shape index: {}]
  %s9 = sld [smem:[#allocation0]]
  $region97: #{stgsa_layer_forward.1} parent=0
    _
  %s11 = ssub.s32 1, %s9
  %s12 = scalar_select 0, %s11, %s9
  $region1: #{stgsa_layer_forward.1} parent=0
    #allocation2 [shape = 'u8[131072]{0}', space=vmem, size = 0x20000, scoped, tag = 'input window, operand 0']
    #allocation3 [shape = 's32[2]{0}', space=sflag, size = 0x8, scoped, tag = 'scoped memory for stgsa_layer_forward.1']
    #allocation4 [shape = 's32[2]{0}', space=sflag, size = 0x8, scoped, tag = 'scoped memory for stgsa_layer_forward.1']
    #allocation5 [shape = 'u8[262144]{0}', space=vmem, size = 0x40000, scoped, tag = 'input window, operand 1, single buffered']
    #allocation6 [shape = 's32[1]{0}', space=sflag, size = 0x4, scoped, tag = 'scoped memory for stgsa_layer_forward.1']
    #allocation7 [shape = 'u8[32768]{0}', space=vmem, size = 0x8000, scoped, tag = 'input window, operand 2, single buffered']
    #allocation8 [shape = 'u8[32768]{0}', space=vmem, size = 0x8000, scoped, tag = 'input window, operand 3, single buffered']
    #allocation9 [shape = 's32[1]{0}', space=sflag, size = 0x4, scoped, tag = 'scoped memory for stgsa_layer_forward.1']
    #allocation10 [shape = 'u8[32768]{0}', space=vmem, size = 0x8000, scoped, tag = 'input window, operand 4, single buffered']
    #allocation11 [shape = 'u8[32768]{0}', space=vmem, size = 0x8000, scoped, tag = 'input window, operand 5, single buffered']
    #allocation12 [shape = 's32[1]{0}', space=sflag, size = 0x4, scoped, tag = 'scoped memory for stgsa_layer_forward.1']
    #allocation13 [shape = 'u8[32768]{0}', space=vmem, size = 0x8000, scoped, tag = 'input window, operand 6, single buffered']
    #allocation14 [shape = 'u8[32768]{0}', space=vmem, size = 0x8000, scoped, tag = 'input window, operand 7, single buffered']
    #allocation15 [shape = 's32[1]{0}', space=sflag, size = 0x4, scoped, tag = 'scoped memory for stgsa_layer_forward.1']
    #allocation16 [shape = 'u8[131072]{0}', space=vmem, size = 0x20000, scoped, tag = 'output window, operand 0']
    %13 = vsyncpa [#allocation3], 0
    %s14 = scalar_lea.sflag [#allocation3], 1
    %15 = vsyncpa %s14, 0
    %16 = vsyncpa [#allocation6], 0
    %17 = vsyncpa [#allocation9], 0
    %18 = vsyncpa [#allocation12], 0
    %19 = vsyncpa [#allocation15], 0
    %20 = vsyncpa [#allocation4], 0
    %s21 = scalar_lea.sflag [#allocation4], 1
    %22 = vsyncpa %s21, 0
    loop: start=0, step=1, limit=4
    $region2: #{stgsa_layer_forward.1} parent=1 // loop_pre_header
      _
    $region3: #{stgsa_layer_forward.1} parent=1 // loop_header
      %s24 = sphi 0, %s28
      %p25 = scmp.ge.s32.totalorder %s24, 4
      %s34 = sphi 0, %s36
      %s37 = sphi 0, %s34
      %s38 = sphi 0, %s37
      %s54 = sphi 0, %s38
      %s58 = sphi 0, %s58
      %s60 = sphi 0, %s58
      %s61 = sphi 0, %s60
      %s75 = sphi 0, %s61
      %s79 = sphi 0, %s79
      %s81 = sphi 0, %s79
      %s82 = sphi 0, %s81
      %s96 = sphi 0, %s82
      %s100 = sphi 0, %s100
      %s102 = sphi 0, %s100
      %s103 = sphi 0, %s102
      %s117 = sphi 0, %s103
      %s121 = sphi 0, %s121
      %s123 = sphi 0, %s121
      %s124 = sphi 0, %s123
      %s138 = sphi 0, %s124
      %s142 = sphi 0, %s142
      %s144 = sphi 0, %s142
      %s145 = sphi 0, %s144
      %s159 = sphi 0, %s145
      %s163 = sphi 0, %s163
      %s165 = sphi 0, %s163
      %s166 = sphi 0, %s165
      %s180 = sphi 0, %s166
      %s184 = sphi 0, %s184
      %s186 = sphi 0, %s184
      %s187 = sphi 0, %s186
      %s201 = sphi 0, %s187
      %s207 = sphi 0, %s209
      %s210 = sphi 0, %s207
      %s211 = sphi 0, %s210
      %s227 = sphi 0, %s211
    $region4: #{stgsa_layer_forward.1} parent=1 // loop_header_branch
      %27 = sbr.rel (%p25) target = $region8
    $region5: #{stgsa_layer_forward.1} parent=1 // loop_body
      %s29 = ssub.s32 %s24, 1
      %s30 = ssub.s32 %s24, 2
      %s31 = sadd.s32 %s24, 1
      %s32 = ssub.s32 %s24, %s31
      %p33 = scmp.eq.s32.totalorder %s32, 0
      %s35 = sadd.s32 %s34, 1
      %s36 = scalar_select %p33, %s34, %s35
      %p39 = pneg %p33
      %p40 = scmp.eq.s32.totalorder %s24, 1
      %p41 = por %p39, %p40
      %p42 = scmp.ne.s32.totalorder %s34, %s37
      %p43 = scmp.eq.s32.totalorder %s24, 0
      %p44 = por %p42, %p43
      %p45 = scmp.ne.s32.totalorder %s34, %s37
      %p46 = scmp.eq.s32.totalorder %s29, 1
      %p47 = por %p45, %p46
      %p48 = scmp.ne.s32.totalorder %s37, %s38
      %p49 = scmp.eq.s32.totalorder %s29, 0
      %p50 = por %p48, %p49
      %p51 = scmp.ne.s32.totalorder %s37, %s38
      %p52 = scmp.eq.s32.totalorder %s30, 1
      %p53 = por %p51, %p52
      %p55 = scmp.ne.s32.totalorder %s38, %s54
      %p56 = scmp.eq.s32.totalorder %s30, 0
      %p57 = por %p55, %p56
      %s59 = sadd.s32 %s58, 1
      %p62 = scmp.eq.s32.totalorder %s24, 1
      %p63 = scmp.ne.s32.totalorder %s58, %s60
      %p64 = scmp.eq.s32.totalorder %s24, 0
      %p65 = por %p63, %p64
      %p66 = scmp.ne.s32.totalorder %s58, %s60
      %p67 = scmp.eq.s32.totalorder %s29, 1
      %p68 = por %p66, %p67
      %p69 = scmp.ne.s32.totalorder %s60, %s61
      %p70 = scmp.eq.s32.totalorder %s29, 0
      %p71 = por %p69, %p70
      %p72 = scmp.ne.s32.totalorder %s60, %s61
      %p73 = scmp.eq.s32.totalorder %s30, 1
      %p74 = por %p72, %p73
      %p76 = scmp.ne.s32.totalorder %s61, %s75
      %p77 = scmp.eq.s32.totalorder %s30, 0
      %p78 = por %p76, %p77
      %s80 = sadd.s32 %s79, 1
      %p83 = scmp.eq.s32.totalorder %s24, 1
      %p84 = scmp.ne.s32.totalorder %s79, %s81
      %p85 = scmp.eq.s32.totalorder %s24, 0
      %p86 = por %p84, %p85
      %p87 = scmp.ne.s32.totalorder %s79, %s81
      %p88 = scmp.eq.s32.totalorder %s29, 1
      %p89 = por %p87, %p88
      %p90 = scmp.ne.s32.totalorder %s81, %s82
      %p91 = scmp.eq.s32.totalorder %s29, 0
      %p92 = por %p90, %p91
      %p93 = scmp.ne.s32.totalorder %s81, %s82
      %p94 = scmp.eq.s32.totalorder %s30, 1
      %p95 = por %p93, %p94
      %p97 = scmp.ne.s32.totalorder %s82, %s96
      %p98 = scmp.eq.s32.totalorder %s30, 0
      %p99 = por %p97, %p98
      %s101 = sadd.s32 %s100, 1
      %p104 = scmp.eq.s32.totalorder %s24, 1
      %p105 = scmp.ne.s32.totalorder %s100, %s102
      %p106 = scmp.eq.s32.totalorder %s24, 0
      %p107 = por %p105, %p106
      %p108 = scmp.ne.s32.totalorder %s100, %s102
      %p109 = scmp.eq.s32.totalorder %s29, 1
      %p110 = por %p108, %p109
      %p111 = scmp.ne.s32.totalorder %s102, %s103
      %p112 = scmp.eq.s32.totalorder %s29, 0
      %p113 = por %p111, %p112
      %p114 = scmp.ne.s32.totalorder %s102, %s103
      %p115 = scmp.eq.s32.totalorder %s30, 1
      %p116 = por %p114, %p115
      %p118 = scmp.ne.s32.totalorder %s103, %s117
      %p119 = scmp.eq.s32.totalorder %s30, 0
      %p120 = por %p118, %p119
      %s122 = sadd.s32 %s121, 1
      %p125 = scmp.eq.s32.totalorder %s24, 1
      %p126 = scmp.ne.s32.totalorder %s121, %s123
      %p127 = scmp.eq.s32.totalorder %s24, 0
      %p128 = por %p126, %p127
      %p129 = scmp.ne.s32.totalorder %s121, %s123
      %p130 = scmp.eq.s32.totalorder %s29, 1
      %p131 = por %p129, %p130
      %p132 = scmp.ne.s32.totalorder %s123, %s124
      %p133 = scmp.eq.s32.totalorder %s29, 0
      %p134 = por %p132, %p133
      %p135 = scmp.ne.s32.totalorder %s123, %s124
      %p136 = scmp.eq.s32.totalorder %s30, 1
      %p137 = por %p135, %p136
      %p139 = scmp.ne.s32.totalorder %s124, %s138
      %p140 = scmp.eq.s32.totalorder %s30, 0
      %p141 = por %p139, %p140
      %s143 = sadd.s32 %s142, 1
      %p146 = scmp.eq.s32.totalorder %s24, 1
      %p147 = scmp.ne.s32.totalorder %s142, %s144
      %p148 = scmp.eq.s32.totalorder %s24, 0
      %p149 = por %p147, %p148
      %p150 = scmp.ne.s32.totalorder %s142, %s144
      %p151 = scmp.eq.s32.totalorder %s29, 1
      %p152 = por %p150, %p151
      %p153 = scmp.ne.s32.totalorder %s144, %s145
      %p154 = scmp.eq.s32.totalorder %s29, 0
      %p155 = por %p153, %p154
      %p156 = scmp.ne.s32.totalorder %s144, %s145
      %p157 = scmp.eq.s32.totalorder %s30, 1
      %p158 = por %p156, %p157
      %p160 = scmp.ne.s32.totalorder %s145, %s159
      %p161 = scmp.eq.s32.totalorder %s30, 0
      %p162 = por %p160, %p161
      %s164 = sadd.s32 %s163, 1
      %p167 = scmp.eq.s32.totalorder %s24, 1
      %p168 = scmp.ne.s32.totalorder %s163, %s165
      %p169 = scmp.eq.s32.totalorder %s24, 0
      %p170 = por %p168, %p169
      %p171 = scmp.ne.s32.totalorder %s163, %s165
      %p172 = scmp.eq.s32.totalorder %s29, 1
      %p173 = por %p171, %p172
      %p174 = scmp.ne.s32.totalorder %s165, %s166
      %p175 = scmp.eq.s32.totalorder %s29, 0
      %p176 = por %p174, %p175
      %p177 = scmp.ne.s32.totalorder %s165, %s166
      %p178 = scmp.eq.s32.totalorder %s30, 1
      %p179 = por %p177, %p178
      %p181 = scmp.ne.s32.totalorder %s166, %s180
      %p182 = scmp.eq.s32.totalorder %s30, 0
      %p183 = por %p181, %p182
      %s185 = sadd.s32 %s184, 1
      %p188 = scmp.eq.s32.totalorder %s24, 1
      %p189 = scmp.ne.s32.totalorder %s184, %s186
      %p190 = scmp.eq.s32.totalorder %s24, 0
      %p191 = por %p189, %p190
      %p192 = scmp.ne.s32.totalorder %s184, %s186
      %p193 = scmp.eq.s32.totalorder %s29, 1
      %p194 = por %p192, %p193
      %p195 = scmp.ne.s32.totalorder %s186, %s187
      %p196 = scmp.eq.s32.totalorder %s29, 0
      %p197 = por %p195, %p196
      %p198 = scmp.ne.s32.totalorder %s186, %s187
      %p199 = scmp.eq.s32.totalorder %s30, 1
      %p200 = por %p198, %p199
      %p202 = scmp.ne.s32.totalorder %s187, %s201
      %p203 = scmp.eq.s32.totalorder %s30, 0
      %p204 = por %p202, %p203
      %s205 = ssub.s32 %s24, %s31
      %p206 = scmp.eq.s32.totalorder %s205, 0
      %s208 = sadd.s32 %s207, 1
      %s209 = scalar_select %p206, %s207, %s208
      %p212 = pneg %p206
      %p213 = scmp.eq.s32.totalorder %s24, 1
      %p214 = por %p212, %p213
      %p215 = scmp.ne.s32.totalorder %s207, %s210
      %p216 = scmp.eq.s32.totalorder %s24, 0
      %p217 = por %p215, %p216
      %p218 = scmp.ne.s32.totalorder %s207, %s210
      %p219 = scmp.eq.s32.totalorder %s29, 1
      %p220 = por %p218, %p219
      %p221 = scmp.ne.s32.totalorder %s210, %s211
      %p222 = scmp.eq.s32.totalorder %s29, 0
      %p223 = por %p221, %p222
      %p224 = scmp.ne.s32.totalorder %s210, %s211
      %p225 = scmp.eq.s32.totalorder %s30, 1
      %p226 = por %p224, %p225
      %p228 = scmp.ne.s32.totalorder %s211, %s227
      %p229 = scmp.eq.s32.totalorder %s30, 0
      %p230 = por %p228, %p229
      %p231 = scmp.le.s32.totalorder 1, %s24
      %p232 = scmp.lt.s32.totalorder %s24, 3
      %p233 = pnand %p231, %p232
      %p234 = pneg %p233
      // Predicated region
      $region9: #{stgsa_layer_forward.1} parent=5 // pred_check
        _
      $region10: #{stgsa_layer_forward.1} parent=5 // pred_check_branch
        %236 = sbr.rel (%p233) target = $region12
      $region11: #{stgsa_layer_forward.1} parent=5 // pred_region
        %s237 = ssub.s32 %s24, 1
        // Predicated region
        $region13: #{stgsa_layer_forward.1} parent=11 // pred_check
          %p238 = pneg %p71
        $region14: #{stgsa_layer_forward.1} parent=11 // pred_check_branch
          %240 = sbr.rel (%p238) target = $region16
        $region15: #{stgsa_layer_forward.1} parent=11 // pred_region
          %s242 = ssub.s32 8192, 8192
          %243 = vsyncadd [#allocation6], %s242
          %s244 = sshll.u32 [#allocation5], 4
          %s245 = int_to_ptr.vmem [resolvable:$true] %s244
          %250 = dma.hbm_to_vmem [thread:$0]  %s1, 8192, %s245, [#allocation6], 128, 128, 8
        $region16: #{stgsa_layer_forward.1} parent=11 // pred_fallthru
          _
        // Predicated region
        $region17: #{stgsa_layer_forward.1} parent=11 // pred_check
          %p251 = pneg %p92
        $region18: #{stgsa_layer_forward.1} parent=11 // pred_check_branch
          %253 = sbr.rel (%p251) target = $region20
        $region19: #{stgsa_layer_forward.1} parent=11 // pred_region
          %s255 = ssub.s32 1024, 1024
          %256 = vsyncadd [#allocation6], %s255
          %s257 = sshll.u32 [#allocation7], 4
          %s258 = int_to_ptr.vmem [resolvable:$true] %s257
          %263 = dma.hbm_to_vmem [thread:$0]  %s2, 1024, %s258, [#allocation6], 128, 128, 8
        $region20: #{stgsa_layer_forward.1} parent=11 // pred_fallthru
          _
        // Predicated region
        $region21: #{stgsa_layer_forward.1} parent=11 // pred_check
          %p264 = pneg %p113
        $region22: #{stgsa_layer_forward.1} parent=11 // pred_check_branch
          %266 = sbr.rel (%p264) target = $region24
        $region23: #{stgsa_layer_forward.1} parent=11 // pred_region
          %s268 = ssub.s32 1024, 1024
          %269 = vsyncadd [#allocation9], %s268
          %s270 = sshll.u32 [#allocation8], 4
          %s271 = int_to_ptr.vmem [resolvable:$true] %s270
          %276 = dma.hbm_to_vmem [thread:$0]  %s3, 1024, %s271, [#allocation9], 128, 128, 8
        $region24: #{stgsa_layer_forward.1} parent=11 // pred_fallthru
          _
        // Predicated region
        $region25: #{stgsa_layer_forward.1} parent=11 // pred_check
          %p277 = pneg %p134
        $region26: #{stgsa_layer_forward.1} parent=11 // pred_check_branch
          %279 = sbr.rel (%p277) target = $region28
        $region27: #{stgsa_layer_forward.1} parent=11 // pred_region
          %s281 = ssub.s32 1024, 1024
          %282 = vsyncadd [#allocation9], %s281
          %s283 = sshll.u32 [#allocation10], 4
          %s284 = int_to_ptr.vmem [resolvable:$true] %s283
          %289 = dma.hbm_to_vmem [thread:$0]  %s4, 1024, %s284, [#allocation9], 128, 128, 8
        $region28: #{stgsa_layer_forward.1} parent=11 // pred_fallthru
          _
        // Predicated region
        $region29: #{stgsa_layer_forward.1} parent=11 // pred_check
          %p290 = pneg %p155
        $region30: #{stgsa_layer_forward.1} parent=11 // pred_check_branch
          %292 = sbr.rel (%p290) target = $region32
        $region31: #{stgsa_layer_forward.1} parent=11 // pred_region
          %s294 = ssub.s32 1024, 1024
          %295 = vsyncadd [#allocation12], %s294
          %s296 = sshll.u32 [#allocation11], 4
          %s297 = int_to_ptr.vmem [resolvable:$true] %s296
          %302 = dma.hbm_to_vmem [thread:$0]  %s5, 1024, %s297, [#allocation12], 128, 128, 8
        $region32: #{stgsa_layer_forward.1} parent=11 // pred_fallthru
          _
        // Predicated region
        $region33: #{stgsa_layer_forward.1} parent=11 // pred_check
          %p303 = pneg %p176
        $region34: #{stgsa_layer_forward.1} parent=11 // pred_check_branch
          %305 = sbr.rel (%p303) target = $region36
        $region35: #{stgsa_layer_forward.1} parent=11 // pred_region
          %s307 = ssub.s32 1024, 1024
          %308 = vsyncadd [#allocation12], %s307
          %s309 = sshll.u32 [#allocation13], 4
          %s310 = int_to_ptr.vmem [resolvable:$true] %s309
          %315 = dma.hbm_to_vmem [thread:$0]  %s6, 1024, %s310, [#allocation12], 128, 128, 8
        $region36: #{stgsa_layer_forward.1} parent=11 // pred_fallthru
          _
        // Predicated region
        $region37: #{stgsa_layer_forward.1} parent=11 // pred_check
          %p316 = pneg %p197
        $region38: #{stgsa_layer_forward.1} parent=11 // pred_check_branch
          %318 = sbr.rel (%p316) target = $region40
        $region39: #{stgsa_layer_forward.1} parent=11 // pred_region
          %s320 = ssub.s32 1024, 1024
          %321 = vsyncadd [#allocation15], %s320
          %s322 = sshll.u32 [#allocation14], 4
          %s323 = int_to_ptr.vmem [resolvable:$true] %s322
          %328 = dma.hbm_to_vmem [thread:$0]  %s7, 1024, %s323, [#allocation15], 128, 128, 8
        $region40: #{stgsa_layer_forward.1} parent=11 // pred_fallthru
          _
      $region12: #{stgsa_layer_forward.1} parent=5 // pred_fallthru
        _
      %p329 = scmp.lt.s32.totalorder %s24, 2
      // Predicated region
      $region41: #{stgsa_layer_forward.1} parent=5 // pred_check
        %p330 = pneg %p329
      $region42: #{stgsa_layer_forward.1} parent=5 // pred_check_branch
        %332 = sbr.rel (%p330) target = $region44
      $region43: #{stgsa_layer_forward.1} parent=5 // pred_region
        // Predicated region
        $region45: #{stgsa_layer_forward.1} parent=43 // pred_check
          %p333 = pneg %p44
        $region46: #{stgsa_layer_forward.1} parent=43 // pred_check_branch
          %335 = sbr.rel (%p333) target = $region48
        $region47: #{stgsa_layer_forward.1} parent=43 // pred_region
          %s336 = sand.u32 %s34, 1
          %s337 = scalar_lea.sflag [#allocation3], %s336
          %s338 = sand.u32 %s34, 1
          %s339 = smul.addr %s338, 128
          %s340 = scalar_lea.vmem [#allocation2], %s339
          %s342 = ssub.s32 2048, 2048
          %343 = vsyncadd %s337, %s342
          %s344 = smul.addr %s24, 16
          %s345 = smul.addr %s344, 128
          %s346 = scalar_lea.hbm %s0, %s345
          %s347 = sshll.u32 %s340, 4
          %s348 = int_to_ptr.vmem [resolvable:$true] %s347
          %353 = dma.hbm_to_vmem [thread:$0]  %s346, 2048, %s348, %s337, 128, 128, 8
        $region48: #{stgsa_layer_forward.1} parent=43 // pred_fallthru
          _
      $region44: #{stgsa_layer_forward.1} parent=5 // pred_fallthru
        _
      %p354 = scmp.le.s32.totalorder 1, %s24
      %p355 = scmp.lt.s32.totalorder %s24, 3
      %p356 = pnand %p354, %p355
      %p357 = pneg %p356
      // Predicated region
      $region49: #{stgsa_layer_forward.1} parent=5 // pred_check
        _
      $region50: #{stgsa_layer_forward.1} parent=5 // pred_check_branch
        %359 = sbr.rel (%p356) target = $region52
      $region51: #{stgsa_layer_forward.1} parent=5 // pred_region
        %s360 = ssub.s32 %s24, 1
        %s361 = sand.u32 %s37, 1
        %s362 = scalar_lea.sflag [#allocation3], %s361
        %s363 = sand.u32 %s37, 1
        %s364 = smul.addr %s363, 128
        %s365 = scalar_lea.vmem [#allocation2], %s364
        // Predicated region
        $region53: #{stgsa_layer_forward.1} parent=51 // pred_check
          %p366 = pneg %p50
        $region54: #{stgsa_layer_forward.1} parent=51 // pred_check_branch
          %368 = sbr.rel (%p366) target = $region56
        $region55: #{stgsa_layer_forward.1} parent=51 // pred_region
          %369 = dma.done %s362, 2048
        $region56: #{stgsa_layer_forward.1} parent=51 // pred_fallthru
          _
        // Predicated region
        $region57: #{stgsa_layer_forward.1} parent=51 // pred_check
          %p370 = pneg %p71
        $region58: #{stgsa_layer_forward.1} parent=51 // pred_check_branch
          %372 = sbr.rel (%p370) target = $region60
        $region59: #{stgsa_layer_forward.1} parent=51 // pred_region
          %373 = dma.done [#allocation6], 8192
        $region60: #{stgsa_layer_forward.1} parent=51 // pred_fallthru
          _
        // Predicated region
        $region61: #{stgsa_layer_forward.1} parent=51 // pred_check
          %p374 = pneg %p92
        $region62: #{stgsa_layer_forward.1} parent=51 // pred_check_branch
          %376 = sbr.rel (%p374) target = $region64
        $region63: #{stgsa_layer_forward.1} parent=51 // pred_region
          %377 = dma.done [#allocation6], 1024
        $region64: #{stgsa_layer_forward.1} parent=51 // pred_fallthru
          _
        // Predicated region
        $region65: #{stgsa_layer_forward.1} parent=51 // pred_check
          %p378 = pneg %p113
        $region66: #{stgsa_layer_forward.1} parent=51 // pred_check_branch
          %380 = sbr.rel (%p378) target = $region68
        $region67: #{stgsa_layer_forward.1} parent=51 // pred_region
          %381 = dma.done [#allocation9], 1024
        $region68: #{stgsa_layer_forward.1} parent=51 // pred_fallthru
          _
        // Predicated region
        $region69: #{stgsa_layer_forward.1} parent=51 // pred_check
          %p382 = pneg %p134
        $region70: #{stgsa_layer_forward.1} parent=51 // pred_check_branch
          %384 = sbr.rel (%p382) target = $region72
        $region71: #{stgsa_layer_forward.1} parent=51 // pred_region
          %385 = dma.done [#allocation9], 1024
        $region72: #{stgsa_layer_forward.1} parent=51 // pred_fallthru
          _
        // Predicated region
        $region73: #{stgsa_layer_forward.1} parent=51 // pred_check
          %p386 = pneg %p155
        $region74: #{stgsa_layer_forward.1} parent=51 // pred_check_branch
          %388 = sbr.rel (%p386) target = $region76
        $region75: #{stgsa_layer_forward.1} parent=51 // pred_region
          %389 = dma.done [#allocation12], 1024
        $region76: #{stgsa_layer_forward.1} parent=51 // pred_fallthru
          _
        // Predicated region
        $region77: #{stgsa_layer_forward.1} parent=51 // pred_check
          %p390 = pneg %p176
        $region78: #{stgsa_layer_forward.1} parent=51 // pred_check_branch
          %392 = sbr.rel (%p390) target = $region80
        $region79: #{stgsa_layer_forward.1} parent=51 // pred_region
          %393 = dma.done [#allocation12], 1024
        $region80: #{stgsa_layer_forward.1} parent=51 // pred_fallthru
          _
        // Predicated region
        $region81: #{stgsa_layer_forward.1} parent=51 // pred_check
          %p394 = pneg %p197
        $region82: #{stgsa_layer_forward.1} parent=51 // pred_check_branch
          %396 = sbr.rel (%p394) target = $region84
        $region83: #{stgsa_layer_forward.1} parent=51 // pred_region
          %397 = dma.done [#allocation15], 1024
        $region84: #{stgsa_layer_forward.1} parent=51 // pred_fallthru
          _
        %s398 = sand.u32 %s37, 1
        %s399 = scalar_lea.sflag [#allocation3], %s398
        %s400 = sand.u32 %s37, 1
        %s401 = smul.addr %s400, 128
        %s402 = scalar_lea.vmem [#allocation2], %s401
        %p403 = pneg %p50
        %p404 = pneg %p47
        %p405 = pneg %p71
        %p406 = pneg %p68
        %p407 = pneg %p92
        %p408 = pneg %p89
        %p409 = pneg %p113
        %p410 = pneg %p110
        %p411 = pneg %p134
        %p412 = pneg %p131
        %p413 = pneg %p155
        %p414 = pneg %p152
        %p415 = pneg %p176
        %p416 = pneg %p173
        %p417 = pneg %p197
        %p418 = pneg %p194
        %p419 = pneg %p223
        %p420 = pneg %p220
        %s421 = sand.u32 %s210, 1
        %s422 = scalar_lea.sflag [#allocation4], %s421
        %s423 = sand.u32 %s210, 1
        %s424 = smul.addr %s423, 128
        %s425 = scalar_lea.vmem [#allocation16], %s424
        %v426 = vld [vmem:[%s365] sm:$0xff]
        %v427 = vld [vmem:[%s365 + $0x8] sm:$0xff]
        %v428 = vld [vmem:[%s365 + $0x10] sm:$0xff]
        %v429 = vld [vmem:[%s365 + $0x18] sm:$0xff]
        %v430 = vld [vmem:[%s365 + $0x20] sm:$0xff]
        %v431 = vld [vmem:[%s365 + $0x28] sm:$0xff]
        %v432 = vld [vmem:[%s365 + $0x30] sm:$0xff]
        %v433 = vld [vmem:[%s365 + $0x38] sm:$0xff]
        %v434 = vld [vmem:[%s365 + $0x40] sm:$0xff]
        %v435 = vld [vmem:[%s365 + $0x48] sm:$0xff]
        %v436 = vld [vmem:[%s365 + $0x50] sm:$0xff]
        %v437 = vld [vmem:[%s365 + $0x58] sm:$0xff]
        %v438 = vld [vmem:[%s365 + $0x60] sm:$0xff]
        %v439 = vld [vmem:[%s365 + $0x68] sm:$0xff]
        %v440 = vld [vmem:[%s365 + $0x70] sm:$0xff]
        %v441 = vld [vmem:[%s365 + $0x78] sm:$0xff]
        %442 = vxpose.xlu0.b32.start [1/16] %v426, 128
        %443 = vxpose.xlu0.b32.cont [2/16] %v427, 128
        %444 = vxpose.xlu0.b32.cont [3/16] %v428, 128
        %445 = vxpose.xlu0.b32.cont [4/16] %v429, 128
        %446 = vxpose.xlu0.b32.cont [5/16] %v430, 128
        %447 = vxpose.xlu0.b32.cont [6/16] %v431, 128
        %448 = vxpose.xlu0.b32.cont [7/16] %v432, 128
        %449 = vxpose.xlu0.b32.cont [8/16] %v433, 128
        %450 = vxpose.xlu0.b32.cont [9/16] %v434, 128
        %451 = vxpose.xlu0.b32.cont [10/16] %v435, 128
        %452 = vxpose.xlu0.b32.cont [11/16] %v436, 128
        %453 = vxpose.xlu0.b32.cont [12/16] %v437, 128
        %454 = vxpose.xlu0.b32.cont [13/16] %v438, 128
        %455 = vxpose.xlu0.b32.cont [14/16] %v439, 128
        %456 = vxpose.xlu0.b32.cont [15/16] %v440, 128
        %457 = vxpose.xlu0.b32.end [16/16] %v441, 128
        %v458 = vpop.trf.xlu0
        %v459 = vpop.trf.xlu0
        %v460 = vpop.trf.xlu0
        %v461 = vpop.trf.xlu0
        %v462 = vpop.trf.xlu0
        %v463 = vpop.trf.xlu0
        %v464 = vpop.trf.xlu0
        %v465 = vpop.trf.xlu0
        %v466 = vpop.trf.xlu0
        %v467 = vpop.trf.xlu0
        %v468 = vpop.trf.xlu0
        %v469 = vpop.trf.xlu0
        %v470 = vpop.trf.xlu0
        %v471 = vpop.trf.xlu0
        %v472 = vpop.trf.xlu0
        %v473 = vpop.trf.xlu0
        %v474 = vld [vmem:[#allocation5] sm:$0xff]
        %v475 = vld [vmem:[#allocation5 + $0x8] sm:$0xff]
        %v476 = vld [vmem:[#allocation5 + $0x10] sm:$0xff]
        %v477 = vld [vmem:[#allocation5 + $0x18] sm:$0xff]
        %v478 = vld [vmem:[#allocation5 + $0x20] sm:$0xff]
        %v479 = vld [vmem:[#allocation5 + $0x28] sm:$0xff]
        %v480 = vld [vmem:[#allocation5 + $0x30] sm:$0xff]
        %v481 = vld [vmem:[#allocation5 + $0x38] sm:$0xff]
        %v482 = vld [vmem:[#allocation5 + $0x40] sm:$0xff]
        %v483 = vld [vmem:[#allocation5 + $0x48] sm:$0xff]
        %v484 = vld [vmem:[#allocation5 + $0x50] sm:$0xff]
        %v485 = vld [vmem:[#allocation5 + $0x58] sm:$0xff]
        %v486 = vld [vmem:[#allocation5 + $0x60] sm:$0xff]
        %v487 = vld [vmem:[#allocation5 + $0x68] sm:$0xff]
        %v488 = vld [vmem:[#allocation5 + $0x70] sm:$0xff]
        %v489 = vld [vmem:[#allocation5 + $0x78] sm:$0xff]
        %490 = vmatprep.subr.mxu0 0.0
        %491 = vmatpush1.msra.mxu0 %v489
        %492 = vmatprep.subr.mxu0 0.0
        %493 = vmatpush1.msra.mxu0 %v488
        %494 = vmatprep.subr.mxu0 0.0
        %495 = vmatpush1.msra.mxu0 %v487
        %496 = vmatprep.subr.mxu0 0.0
        %497 = vmatpush1.msra.mxu0 %v486
        %498 = vmatprep.subr.mxu0 0.0
        %499 = vmatpush1.msra.mxu0 %v485
        %500 = vmatprep.subr.mxu0 0.0
        %501 = vmatpush1.msra.mxu0 %v484
        %502 = vmatprep.subr.mxu0 0.0
        %503 = vmatpush1.msra.mxu0 %v483
        %504 = vmatprep.subr.mxu0 0.0
        %505 = vmatpush1.msra.mxu0 %v482
        %506 = vmatprep.subr.mxu0 0.0
        %507 = vmatpush1.msra.mxu0 %v481
        %508 = vmatprep.subr.mxu0 0.0
        %509 = vmatpush1.msra.mxu0 %v480
        %510 = vmatprep.subr.mxu0 0.0
        %511 = vmatpush1.msra.mxu0 %v479
        %512 = vmatprep.subr.mxu0 0.0
        %513 = vmatpush1.msra.mxu0 %v478
        %514 = vmatprep.subr.mxu0 0.0
        %515 = vmatpush1.msra.mxu0 %v477
        %516 = vmatprep.subr.mxu0 0.0
        %517 = vmatpush1.msra.mxu0 %v476
        %518 = vmatprep.subr.mxu0 0.0
        %519 = vmatpush1.msra.mxu0 %v475
        %520 = vmatprep.subr.mxu0 0.0
        %521 = vmatpush1.msra.mxu0 %v474
        %522 = vmatprep.subr.mxu0 0.0
        %523 = vmatpush2.msra.mxu0 0.0
        %524 = vmatprep.subr.mxu0 0.0
        %525 = vmatpush2.msra.mxu0 0.0
        %526 = vmatprep.subr.mxu0 0.0
        %527 = vmatpush2.msra.mxu0 0.0
        %528 = vmatprep.subr.mxu0 0.0
        %529 = vmatpush2.msra.mxu0 0.0
        %530 = vmatprep.subr.mxu0 0.0
        %531 = vmatpush2.msra.mxu0 0.0
        %532 = vmatprep.subr.mxu0 0.0
        %533 = vmatpush2.msra.mxu0 0.0
        %534 = vmatprep.subr.mxu0 0.0
        %535 = vmatpush2.msra.mxu0 0.0
        %536 = vmatprep.subr.mxu0 0.0
        %537 = vmatpush2.msra.mxu0 0.0
        %538 = vmatprep.subr.mxu0 0.0
        %539 = vmatpush2.msra.mxu0 0.0
        %540 = vmatprep.subr.mxu0 0.0
        %541 = vmatpush2.msra.mxu0 0.0
        %542 = vmatprep.subr.mxu0 0.0
        %543 = vmatpush2.msra.mxu0 0.0
        %544 = vmatprep.subr.mxu0 0.0
        %545 = vmatpush2.msra.mxu0 0.0
        %546 = vmatprep.subr.mxu0 0.0
        %547 = vmatpush2.msra.mxu0 0.0
        %548 = vmatprep.subr.mxu0 0.0
        %549 = vmatpush2.msra.mxu0 0.0
        %550 = vmatprep.subr.mxu0 0.0
        %551 = vmatpush2.msra.mxu0 0.0
        %552 = vmatprep.subr.mxu0 0.0
        %553 = vmatpush2.msra.mxu0 0.0
        %554 = vmatprep.mubr.f32.mxu0 0.0
        %555 = vmatmul.mubr.f32.gmra.mxu0 %v458
        %v556 = vpop.f32.mrf.mxu0
        %v557 = vadd.f32 0.0, %v556
        %v558 = vpop.f32.mrf.mxu0
        %559 = vmatprep.mubr.f32.mxu0 0.0
        %560 = vmatmul.mubr.f32.gmra.mxu0 %v459
        %v561 = vpop.f32.mrf.mxu0
        %v562 = vadd.f32 0.0, %v561
        %v563 = vpop.f32.mrf.mxu0
        %564 = vdwg.mxu0
        %v565 = vld [vmem:[#allocation7] sm:$0xff]
        %v566 = vld [vmem:[#allocation7 + $0x8] sm:$0xff]
        %v567 = vld [vmem:[#allocation8] sm:$0xff]
        %v568 = vld [vmem:[#allocation8 + $0x8] sm:$0xff]
        %vm569 = vcmask 130048
        %v571 = vsel %vm569, %v567, 0
        %v574 = vsel %vm569, %v568, 0
        %576 = vmatprep.subr.mxu0 0.0
        %577 = vmatpush1.msra.mxu0 0.0
        %578 = vmatprep.subr.mxu0 0.0
        %579 = vmatpush1.msra.mxu0 0.0
        %580 = vmatprep.subr.mxu0 0.0
        %581 = vmatpush1.msra.mxu0 0.0
        %582 = vmatprep.subr.mxu0 0.0
        %583 = vmatpush1.msra.mxu0 0.0
        %584 = vmatprep.subr.mxu0 0.0
        %585 = vmatpush1.msra.mxu0 0.0
        %586 = vmatprep.subr.mxu0 0.0
        %587 = vmatpush1.msra.mxu0 0.0
        %588 = vmatprep.subr.mxu0 0.0
        %589 = vmatpush1.msra.mxu0 0.0
        %590 = vmatprep.subr.mxu0 0.0
        %591 = vmatpush1.msra.mxu0 0.0
        %592 = vmatprep.subr.mxu0 0.0
        %593 = vmatpush1.msra.mxu0 0.0
        %594 = vmatprep.subr.mxu0 0.0
        %595 = vmatpush1.msra.mxu0 0.0
        %596 = vmatprep.subr.mxu0 0.0
        %597 = vmatpush1.msra.mxu0 0.0
        %598 = vmatprep.subr.mxu0 0.0
        %599 = vmatpush1.msra.mxu0 0.0
        %600 = vmatprep.subr.mxu0 0.0
        %601 = vmatpush1.msra.mxu0 0.0
        %602 = vmatprep.subr.mxu0 0.0
        %603 = vmatpush1.msra.mxu0 0.0
        %604 = vmatprep.subr.mxu0 0.0
        %605 = vmatpush1.msra.mxu0 %v459
        %606 = vmatprep.subr.mxu0 0.0
        %607 = vmatpush1.msra.mxu0 %v458
        %608 = vmatprep.subr.mxu0 0.0
        %609 = vmatpush2.msra.mxu0 0.0
        %610 = vmatprep.subr.mxu0 0.0
        %611 = vmatpush2.msra.mxu0 0.0
        %612 = vmatprep.subr.mxu0 0.0
        %613 = vmatpush2.msra.mxu0 0.0
        %614 = vmatprep.subr.mxu0 0.0
        %615 = vmatpush2.msra.mxu0 0.0
        %616 = vmatprep.subr.mxu0 0.0
        %617 = vmatpush2.msra.mxu0 0.0
        %618 = vmatprep.subr.mxu0 0.0
        %619 = vmatpush2.msra.mxu0 0.0
        %620 = vmatprep.subr.mxu0 0.0
        %621 = vmatpush2.msra.mxu0 0.0
        %622 = vmatprep.subr.mxu0 0.0
        %623 = vmatpush2.msra.mxu0 0.0
        %624 = vmatprep.subr.mxu0 0.0
        %625 = vmatpush2.msra.mxu0 0.0
        %626 = vmatprep.subr.mxu0 0.0
        %627 = vmatpush2.msra.mxu0 0.0
        %628 = vmatprep.subr.mxu0 0.0
        %629 = vmatpush2.msra.mxu0 0.0
        %630 = vmatprep.subr.mxu0 0.0
        %631 = vmatpush2.msra.mxu0 0.0
        %632 = vmatprep.subr.mxu0 0.0
        %633 = vmatpush2.msra.mxu0 0.0
        %634 = vmatprep.subr.mxu0 0.0
        %635 = vmatpush2.msra.mxu0 0.0
        %636 = vmatprep.subr.mxu0 0.0
        %637 = vmatpush2.msra.mxu0 0.0
        %638 = vmatprep.subr.mxu0 0.0
        %639 = vmatpush2.msra.mxu0 0.0
        %640 = vmatprep.mubr.f32.mxu0 0.0
        %641 = vmatmul.mubr.f32.gmra.mxu0 %v571
        %v642 = vpop.f32.mrf.mxu0
        %v643 = vadd.f32 0.0, %v642
        %v644 = vpop.f32.mrf.mxu0
        %645 = vmatprep.mubr.f32.mxu0 0.0
        %646 = vmatmul.mubr.f32.gmra.mxu0 %v574
        %v647 = vpop.f32.mrf.mxu0
        %v648 = vadd.f32 0.0, %v647
        %v649 = vpop.f32.mrf.mxu0
        %650 = vdwg.mxu0
        %v652 = vsel %vm569, %v565, 0
        %v655 = vsel %vm569, %v566, 0
        %657 = vmatprep.subr.mxu0 0.0
        %658 = vmatpush1.msra.mxu0 0.0
        %659 = vmatprep.subr.mxu0 0.0
        %660 = vmatpush1.msra.mxu0 0.0
        %661 = vmatprep.subr.mxu0 0.0
        %662 = vmatpush1.msra.mxu0 0.0
        %663 = vmatprep.subr.mxu0 0.0
        %664 = vmatpush1.msra.mxu0 0.0
        %665 = vmatprep.subr.mxu0 0.0
        %666 = vmatpush1.msra.mxu0 0.0
        %667 = vmatprep.subr.mxu0 0.0
        %668 = vmatpush1.msra.mxu0 0.0
        %669 = vmatprep.subr.mxu0 0.0
        %670 = vmatpush1.msra.mxu0 0.0
        %671 = vmatprep.subr.mxu0 0.0
        %672 = vmatpush1.msra.mxu0 0.0
        %673 = vmatprep.subr.mxu0 0.0
        %674 = vmatpush1.msra.mxu0 0.0
        %675 = vmatprep.subr.mxu0 0.0
        %676 = vmatpush1.msra.mxu0 0.0
        %677 = vmatprep.subr.mxu0 0.0
        %678 = vmatpush1.msra.mxu0 0.0
        %679 = vmatprep.subr.mxu0 0.0
        %680 = vmatpush1.msra.mxu0 0.0
        %681 = vmatprep.subr.mxu0 0.0
        %682 = vmatpush1.msra.mxu0 0.0
        %683 = vmatprep.subr.mxu0 0.0
        %684 = vmatpush1.msra.mxu0 0.0
        %685 = vmatprep.subr.mxu0 0.0
        %686 = vmatpush1.msra.mxu0 %v562
        %687 = vmatprep.subr.mxu0 0.0
        %688 = vmatpush1.msra.mxu0 %v557
        %689 = vmatprep.subr.mxu0 0.0
        %690 = vmatpush2.msra.mxu0 0.0
        %691 = vmatprep.subr.mxu0 0.0
        %692 = vmatpush2.msra.mxu0 0.0
        %693 = vmatprep.subr.mxu0 0.0
        %694 = vmatpush2.msra.mxu0 0.0
        %695 = vmatprep.subr.mxu0 0.0
        %696 = vmatpush2.msra.mxu0 0.0
        %697 = vmatprep.subr.mxu0 0.0
        %698 = vmatpush2.msra.mxu0 0.0
        %699 = vmatprep.subr.mxu0 0.0
        %700 = vmatpush2.msra.mxu0 0.0
        %701 = vmatprep.subr.mxu0 0.0
        %702 = vmatpush2.msra.mxu0 0.0
        %703 = vmatprep.subr.mxu0 0.0
        %704 = vmatpush2.msra.mxu0 0.0
        %705 = vmatprep.subr.mxu0 0.0
        %706 = vmatpush2.msra.mxu0 0.0
        %707 = vmatprep.subr.mxu0 0.0
        %708 = vmatpush2.msra.mxu0 0.0
        %709 = vmatprep.subr.mxu0 0.0
        %710 = vmatpush2.msra.mxu0 0.0
        %711 = vmatprep.subr.mxu0 0.0
        %712 = vmatpush2.msra.mxu0 0.0
        %713 = vmatprep.subr.mxu0 0.0
        %714 = vmatpush2.msra.mxu0 0.0
        %715 = vmatprep.subr.mxu0 0.0
        %716 = vmatpush2.msra.mxu0 0.0
        %717 = vmatprep.subr.mxu0 0.0
        %718 = vmatpush2.msra.mxu0 0.0
        %719 = vmatprep.subr.mxu0 0.0
        %720 = vmatpush2.msra.mxu0 0.0
        %721 = vmatprep.mubr.f32.mxu0 0.0
        %722 = vmatmul.mubr.f32.gmra.mxu0 %v652
        %v723 = vpop.f32.mrf.mxu0
        %v724 = vadd.f32 %v643, %v723
        %v725 = vpop.f32.mrf.mxu0
        %726 = vmatprep.mubr.f32.mxu0 0.0
        %727 = vmatmul.mubr.f32.gmra.mxu0 %v655
        %v728 = vpop.f32.mrf.mxu0
        %v729 = vadd.f32 %v648, %v728
        %v730 = vpop.f32.mrf.mxu0
        %731 = vdwg.mxu0
        %v732 = vld [vmem:[#allocation13] sm:$0xff]
        %v733 = vld [vmem:[#allocation13 + $0x8] sm:$0xff]
        %v734 = vadd.f32 %v724, %v732
        %v735 = vadd.f32 %v729, %v733
        %v736 = vld [vmem:[#allocation10] sm:$0xff]
        %v737 = vld [vmem:[#allocation10 + $0x8] sm:$0xff]
        %v738 = vld [vmem:[#allocation11] sm:$0xff]
        %v739 = vld [vmem:[#allocation11 + $0x8] sm:$0xff]
        %v741 = vsel %vm569, %v738, 0
        %v744 = vsel %vm569, %v739, 0
        %746 = vmatprep.subr.mxu0 0.0
        %747 = vmatpush1.msra.mxu0 0.0
        %748 = vmatprep.subr.mxu0 0.0
        %749 = vmatpush1.msra.mxu0 0.0
        %750 = vmatprep.subr.mxu0 0.0
        %751 = vmatpush1.msra.mxu0 0.0
        %752 = vmatprep.subr.mxu0 0.0
        %753 = vmatpush1.msra.mxu0 0.0
        %754 = vmatprep.subr.mxu0 0.0
        %755 = vmatpush1.msra.mxu0 0.0
        %756 = vmatprep.subr.mxu0 0.0
        %757 = vmatpush1.msra.mxu0 0.0
        %758 = vmatprep.subr.mxu0 0.0
        %759 = vmatpush1.msra.mxu0 0.0
        %760 = vmatprep.subr.mxu0 0.0
        %761 = vmatpush1.msra.mxu0 0.0
        %762 = vmatprep.subr.mxu0 0.0
        %763 = vmatpush1.msra.mxu0 0.0
        %764 = vmatprep.subr.mxu0 0.0
        %765 = vmatpush1.msra.mxu0 0.0
        %766 = vmatprep.subr.mxu0 0.0
        %767 = vmatpush1.msra.mxu0 0.0
        %768 = vmatprep.subr.mxu0 0.0
        %769 = vmatpush1.msra.mxu0 0.0
        %770 = vmatprep.subr.mxu0 0.0
        %771 = vmatpush1.msra.mxu0 0.0
        %772 = vmatprep.subr.mxu0 0.0
        %773 = vmatpush1.msra.mxu0 0.0
        %774 = vmatprep.subr.mxu0 0.0
        %775 = vmatpush1.msra.mxu0 %v459
        %776 = vmatprep.subr.mxu0 0.0
        %777 = vmatpush1.msra.mxu0 %v458
        %778 = vmatprep.subr.mxu0 0.0
        %779 = vmatpush2.msra.mxu0 0.0
        %780 = vmatprep.subr.mxu0 0.0
        %781 = vmatpush2.msra.mxu0 0.0
        %782 = vmatprep.subr.mxu0 0.0
        %783 = vmatpush2.msra.mxu0 0.0
        %784 = vmatprep.subr.mxu0 0.0
        %785 = vmatpush2.msra.mxu0 0.0
        %786 = vmatprep.subr.mxu0 0.0
        %787 = vmatpush2.msra.mxu0 0.0
        %788 = vmatprep.subr.mxu0 0.0
        %789 = vmatpush2.msra.mxu0 0.0
        %790 = vmatprep.subr.mxu0 0.0
        %791 = vmatpush2.msra.mxu0 0.0
        %792 = vmatprep.subr.mxu0 0.0
        %793 = vmatpush2.msra.mxu0 0.0
        %794 = vmatprep.subr.mxu0 0.0
        %795 = vmatpush2.msra.mxu0 0.0
        %796 = vmatprep.subr.mxu0 0.0
        %797 = vmatpush2.msra.mxu0 0.0
        %798 = vmatprep.subr.mxu0 0.0
        %799 = vmatpush2.msra.mxu0 0.0
        %800 = vmatprep.subr.mxu0 0.0
        %801 = vmatpush2.msra.mxu0 0.0
        %802 = vmatprep.subr.mxu0 0.0
        %803 = vmatpush2.msra.mxu0 0.0
        %804 = vmatprep.subr.mxu0 0.0
        %805 = vmatpush2.msra.mxu0 0.0
        %806 = vmatprep.subr.mxu0 0.0
        %807 = vmatpush2.msra.mxu0 0.0
        %808 = vmatprep.subr.mxu0 0.0
        %809 = vmatpush2.msra.mxu0 0.0
        %810 = vmatprep.mubr.f32.mxu0 0.0
        %811 = vmatmul.mubr.f32.gmra.mxu0 %v741
        %v812 = vpop.f32.mrf.mxu0
        %v813 = vadd.f32 0.0, %v812
        %v814 = vpop.f32.mrf.mxu0
        %815 = vmatprep.mubr.f32.mxu0 0.0
        %816 = vmatmul.mubr.f32.gmra.mxu0 %v744
        %v817 = vpop.f32.mrf.mxu0
        %v818 = vadd.f32 0.0, %v817
        %v819 = vpop.f32.mrf.mxu0
        %820 = vdwg.mxu0
        %v822 = vsel %vm569, %v736, 0
        %v825 = vsel %vm569, %v737, 0
        %827 = vmatprep.subr.mxu0 0.0
        %828 = vmatpush1.msra.mxu0 0.0
        %829 = vmatprep.subr.mxu0 0.0
        %830 = vmatpush1.msra.mxu0 0.0
        %831 = vmatprep.subr.mxu0 0.0
        %832 = vmatpush1.msra.mxu0 0.0
        %833 = vmatprep.subr.mxu0 0.0
        %834 = vmatpush1.msra.mxu0 0.0
        %835 = vmatprep.subr.mxu0 0.0
        %836 = vmatpush1.msra.mxu0 0.0
        %837 = vmatprep.subr.mxu0 0.0
        %838 = vmatpush1.msra.mxu0 0.0
        %839 = vmatprep.subr.mxu0 0.0
        %840 = vmatpush1.msra.mxu0 0.0
        %841 = vmatprep.subr.mxu0 0.0
        %842 = vmatpush1.msra.mxu0 0.0
        %843 = vmatprep.subr.mxu0 0.0
        %844 = vmatpush1.msra.mxu0 0.0
        %845 = vmatprep.subr.mxu0 0.0
        %846 = vmatpush1.msra.mxu0 0.0
        %847 = vmatprep.subr.mxu0 0.0
        %848 = vmatpush1.msra.mxu0 0.0
        %849 = vmatprep.subr.mxu0 0.0
        %850 = vmatpush1.msra.mxu0 0.0
        %851 = vmatprep.subr.mxu0 0.0
        %852 = vmatpush1.msra.mxu0 0.0
        %853 = vmatprep.subr.mxu0 0.0
        %854 = vmatpush1.msra.mxu0 0.0
        %855 = vmatprep.subr.mxu0 0.0
        %856 = vmatpush1.msra.mxu0 %v562
        %857 = vmatprep.subr.mxu0 0.0
        %858 = vmatpush1.msra.mxu0 %v557
        %859 = vmatprep.subr.mxu0 0.0
        %860 = vmatpush2.msra.mxu0 0.0
        %861 = vmatprep.subr.mxu0 0.0
        %862 = vmatpush2.msra.mxu0 0.0
        %863 = vmatprep.subr.mxu0 0.0
        %864 = vmatpush2.msra.mxu0 0.0
        %865 = vmatprep.subr.mxu0 0.0
        %866 = vmatpush2.msra.mxu0 0.0
        %867 = vmatprep.subr.mxu0 0.0
        %868 = vmatpush2.msra.mxu0 0.0
        %869 = vmatprep.subr.mxu0 0.0
        %870 = vmatpush2.msra.mxu0 0.0
        %871 = vmatprep.subr.mxu0 0.0
        %872 = vmatpush2.msra.mxu0 0.0
        %873 = vmatprep.subr.mxu0 0.0
        %874 = vmatpush2.msra.mxu0 0.0
        %875 = vmatprep.subr.mxu0 0.0
        %876 = vmatpush2.msra.mxu0 0.0
        %877 = vmatprep.subr.mxu0 0.0
        %878 = vmatpush2.msra.mxu0 0.0
        %879 = vmatprep.subr.mxu0 0.0
        %880 = vmatpush2.msra.mxu0 0.0
        %881 = vmatprep.subr.mxu0 0.0
        %882 = vmatpush2.msra.mxu0 0.0
        %883 = vmatprep.subr.mxu0 0.0
        %884 = vmatpush2.msra.mxu0 0.0
        %885 = vmatprep.subr.mxu0 0.0
        %886 = vmatpush2.msra.mxu0 0.0
        %887 = vmatprep.subr.mxu0 0.0
        %888 = vmatpush2.msra.mxu0 0.0
        %889 = vmatprep.subr.mxu0 0.0
        %890 = vmatpush2.msra.mxu0 0.0
        %891 = vmatprep.mubr.f32.mxu0 0.0
        %892 = vmatmul.mubr.f32.gmra.mxu0 %v822
        %v893 = vpop.f32.mrf.mxu0
        %v894 = vadd.f32 %v813, %v893
        %v895 = vpop.f32.mrf.mxu0
        %896 = vmatprep.mubr.f32.mxu0 0.0
        %897 = vmatmul.mubr.f32.gmra.mxu0 %v825
        %v898 = vpop.f32.mrf.mxu0
        %v899 = vadd.f32 %v818, %v898
        %v900 = vpop.f32.mrf.mxu0
        %901 = vdwg.mxu0
        %v902 = vld [vmem:[#allocation14] sm:$0xff]
        %v903 = vld [vmem:[#allocation14 + $0x8] sm:$0xff]
        %v904 = vadd.f32 %v894, %v902
        %v905 = vadd.f32 %v899, %v903
        %v906 = vxor.u32 %v904, 2147483648
        %v907 = vxor.u32 %v905, 2147483648
        %v908 = vmul.f32 %v906, 1.442695
        %v909 = vpow.pop %v908
        %v910 = vmul.f32 %v907, 1.442695
        %v911 = vpow.pop %v910
        %v912 = vadd.f32 %v909, 1.0
        %v913 = vadd.f32 %v911, 1.0
        %v914 = vrcp.pop %v912
        %v915 = vmul.f32 1.0, %v914
        %v916 = vrcp.pop %v913
        %v917 = vmul.f32 1.0, %v916
        %v918 = vmul.f32 %v734, %v915
        %v919 = vmul.f32 %v735, %v917
        %s920 = scalar_lea.vmem [#allocation5], 128
        %v921 = vld [vmem:[%s920] sm:$0xff]
        %v922 = vld [vmem:[%s920 + $0x8] sm:$0xff]
        %v923 = vld [vmem:[%s920 + $0x10] sm:$0xff]
        %v924 = vld [vmem:[%s920 + $0x18] sm:$0xff]
        %v925 = vld [vmem:[%s920 + $0x20] sm:$0xff]
        %v926 = vld [vmem:[%s920 + $0x28] sm:$0xff]
        %v927 = vld [vmem:[%s920 + $0x30] sm:$0xff]
        %v928 = vld [vmem:[%s920 + $0x38] sm:$0xff]
        %v929 = vld [vmem:[%s920 + $0x40] sm:$0xff]
        %v930 = vld [vmem:[%s920 + $0x48] sm:$0xff]
        %v931 = vld [vmem:[%s920 + $0x50] sm:$0xff]
        %v932 = vld [vmem:[%s920 + $0x58] sm:$0xff]
        %v933 = vld [vmem:[%s920 + $0x60] sm:$0xff]
        %v934 = vld [vmem:[%s920 + $0x68] sm:$0xff]
        %v935 = vld [vmem:[%s920 + $0x70] sm:$0xff]
        %v936 = vld [vmem:[%s920 + $0x78] sm:$0xff]
        %937 = vmatprep.subr.mxu0 0.0
        %938 = vmatpush1.msra.mxu0 %v936
        %939 = vmatprep.subr.mxu0 0.0
        %940 = vmatpush1.msra.mxu0 %v935
        %941 = vmatprep.subr.mxu0 0.0
        %942 = vmatpush1.msra.mxu0 %v934
        %943 = vmatprep.subr.mxu0 0.0
        %944 = vmatpush1.msra.mxu0 %v933
        %945 = vmatprep.subr.mxu0 0.0
        %946 = vmatpush1.msra.mxu0 %v932
        %947 = vmatprep.subr.mxu0 0.0
        %948 = vmatpush1.msra.mxu0 %v931
        %949 = vmatprep.subr.mxu0 0.0
        %950 = vmatpush1.msra.mxu0 %v930
        %951 = vmatprep.subr.mxu0 0.0
        %952 = vmatpush1.msra.mxu0 %v929
        %953 = vmatprep.subr.mxu0 0.0
        %954 = vmatpush1.msra.mxu0 %v928
        %955 = vmatprep.subr.mxu0 0.0
        %956 = vmatpush1.msra.mxu0 %v927
        %957 = vmatprep.subr.mxu0 0.0
        %958 = vmatpush1.msra.mxu0 %v926
        %959 = vmatprep.subr.mxu0 0.0
        %960 = vmatpush1.msra.mxu0 %v925
        %961 = vmatprep.subr.mxu0 0.0
        %962 = vmatpush1.msra.mxu0 %v924
        %963 = vmatprep.subr.mxu0 0.0
        %964 = vmatpush1.msra.mxu0 %v923
        %965 = vmatprep.subr.mxu0 0.0
        %966 = vmatpush1.msra.mxu0 %v922
        %967 = vmatprep.subr.mxu0 0.0
        %968 = vmatpush1.msra.mxu0 %v921
        %969 = vmatprep.subr.mxu0 0.0
        %970 = vmatpush2.msra.mxu0 0.0
        %971 = vmatprep.subr.mxu0 0.0
        %972 = vmatpush2.msra.mxu0 0.0
        %973 = vmatprep.subr.mxu0 0.0
        %974 = vmatpush2.msra.mxu0 0.0
        %975 = vmatprep.subr.mxu0 0.0
        %976 = vmatpush2.msra.mxu0 0.0
        %977 = vmatprep.subr.mxu0 0.0
        %978 = vmatpush2.msra.mxu0 0.0
        %979 = vmatprep.subr.mxu0 0.0
        %980 = vmatpush2.msra.mxu0 0.0
        %981 = vmatprep.subr.mxu0 0.0
        %982 = vmatpush2.msra.mxu0 0.0
        %983 = vmatprep.subr.mxu0 0.0
        %984 = vmatpush2.msra.mxu0 0.0
        %985 = vmatprep.subr.mxu0 0.0
        %986 = vmatpush2.msra.mxu0 0.0
        %987 = vmatprep.subr.mxu0 0.0
        %988 = vmatpush2.msra.mxu0 0.0
        %989 = vmatprep.subr.mxu0 0.0
        %990 = vmatpush2.msra.mxu0 0.0
        %991 = vmatprep.subr.mxu0 0.0
        %992 = vmatpush2.msra.mxu0 0.0
        %993 = vmatprep.subr.mxu0 0.0
        %994 = vmatpush2.msra.mxu0 0.0
        %995 = vmatprep.subr.mxu0 0.0
        %996 = vmatpush2.msra.mxu0 0.0
        %997 = vmatprep.subr.mxu0 0.0
        %998 = vmatpush2.msra.mxu0 0.0
        %999 = vmatprep.subr.mxu0 0.0
        %1000 = vmatpush2.msra.mxu0 0.0
        %1001 = vmatprep.mubr.f32.mxu0 0.0
        %1002 = vmatmul.mubr.f32.gmra.mxu0 %v918
        %v1003 = vpop.f32.mrf.mxu0
        %v1004 = vadd.f32 0.0, %v1003
        %v1005 = vpop.f32.mrf.mxu0
        %1006 = vmatprep.mubr.f32.mxu0 0.0
        %1007 = vmatmul.mubr.f32.gmra.mxu0 %v919
        %v1008 = vpop.f32.mrf.mxu0
        %v1009 = vadd.f32 0.0, %v1008
        %v1010 = vpop.f32.mrf.mxu0
        %1011 = vdwg.mxu0
        %s1012 = scalar_lea.vmem [#allocation7], 16
        %v1013 = vld [vmem:[%s1012] sm:$0xff]
        %v1014 = vld [vmem:[%s1012 + $0x8] sm:$0xff]
        %s1015 = scalar_lea.vmem [#allocation8], 16
        %v1016 = vld [vmem:[%s1015] sm:$0xff]
        %v1017 = vld [vmem:[%s1015 + $0x8] sm:$0xff]
        %v1019 = vsel %vm569, %v1016, 0
        %v1022 = vsel %vm569, %v1017, 0
        %1024 = vmatprep.subr.mxu0 0.0
        %1025 = vmatpush1.msra.mxu0 0.0
        %1026 = vmatprep.subr.mxu0 0.0
        %1027 = vmatpush1.msra.mxu0 0.0
        %1028 = vmatprep.subr.mxu0 0.0
        %1029 = vmatpush1.msra.mxu0 0.0
        %1030 = vmatprep.subr.mxu0 0.0
        %1031 = vmatpush1.msra.mxu0 0.0
        %1032 = vmatprep.subr.mxu0 0.0
        %1033 = vmatpush1.msra.mxu0 0.0
        %1034 = vmatprep.subr.mxu0 0.0
        %1035 = vmatpush1.msra.mxu0 0.0
        %1036 = vmatprep.subr.mxu0 0.0
        %1037 = vmatpush1.msra.mxu0 0.0
        %1038 = vmatprep.subr.mxu0 0.0
        %1039 = vmatpush1.msra.mxu0 0.0
        %1040 = vmatprep.subr.mxu0 0.0
        %1041 = vmatpush1.msra.mxu0 0.0
        %1042 = vmatprep.subr.mxu0 0.0
        %1043 = vmatpush1.msra.mxu0 0.0
        %1044 = vmatprep.subr.mxu0 0.0
        %1045 = vmatpush1.msra.mxu0 0.0
        %1046 = vmatprep.subr.mxu0 0.0
        %1047 = vmatpush1.msra.mxu0 0.0
        %1048 = vmatprep.subr.mxu0 0.0
        %1049 = vmatpush1.msra.mxu0 0.0
        %1050 = vmatprep.subr.mxu0 0.0
        %1051 = vmatpush1.msra.mxu0 0.0
        %1052 = vmatprep.subr.mxu0 0.0
        %1053 = vmatpush1.msra.mxu0 %v919
        %1054 = vmatprep.subr.mxu0 0.0
        %1055 = vmatpush1.msra.mxu0 %v918
        %1056 = vmatprep.subr.mxu0 0.0
        %1057 = vmatpush2.msra.mxu0 0.0
        %1058 = vmatprep.subr.mxu0 0.0
        %1059 = vmatpush2.msra.mxu0 0.0
        %1060 = vmatprep.subr.mxu0 0.0
        %1061 = vmatpush2.msra.mxu0 0.0
        %1062 = vmatprep.subr.mxu0 0.0
        %1063 = vmatpush2.msra.mxu0 0.0
        %1064 = vmatprep.subr.mxu0 0.0
        %1065 = vmatpush2.msra.mxu0 0.0
        %1066 = vmatprep.subr.mxu0 0.0
        %1067 = vmatpush2.msra.mxu0 0.0
        %1068 = vmatprep.subr.mxu0 0.0
        %1069 = vmatpush2.msra.mxu0 0.0
        %1070 = vmatprep.subr.mxu0 0.0
        %1071 = vmatpush2.msra.mxu0 0.0
        %1072 = vmatprep.subr.mxu0 0.0
        %1073 = vmatpush2.msra.mxu0 0.0
        %1074 = vmatprep.subr.mxu0 0.0
        %1075 = vmatpush2.msra.mxu0 0.0
        %1076 = vmatprep.subr.mxu0 0.0
        %1077 = vmatpush2.msra.mxu0 0.0
        %1078 = vmatprep.subr.mxu0 0.0
        %1079 = vmatpush2.msra.mxu0 0.0
        %1080 = vmatprep.subr.mxu0 0.0
        %1081 = vmatpush2.msra.mxu0 0.0
        %1082 = vmatprep.subr.mxu0 0.0
        %1083 = vmatpush2.msra.mxu0 0.0
        %1084 = vmatprep.subr.mxu0 0.0
        %1085 = vmatpush2.msra.mxu0 0.0
        %1086 = vmatprep.subr.mxu0 0.0
        %1087 = vmatpush2.msra.mxu0 0.0
        %1088 = vmatprep.mubr.f32.mxu0 0.0
        %1089 = vmatmul.mubr.f32.gmra.mxu0 %v1019
        %v1090 = vpop.f32.mrf.mxu0
        %v1091 = vadd.f32 0.0, %v1090
        %v1092 = vpop.f32.mrf.mxu0
        %1093 = vmatprep.mubr.f32.mxu0 0.0
        %1094 = vmatmul.mubr.f32.gmra.mxu0 %v1022
        %v1095 = vpop.f32.mrf.mxu0
        %v1096 = vadd.f32 0.0, %v1095
        %v1097 = vpop.f32.mrf.mxu0
        %1098 = vdwg.mxu0
        %v1100 = vsel %vm569, %v1013, 0
        %v1103 = vsel %vm569, %v1014, 0
        %1105 = vmatprep.subr.mxu0 0.0
        %1106 = vmatpush1.msra.mxu0 0.0
        %1107 = vmatprep.subr.mxu0 0.0
        %1108 = vmatpush1.msra.mxu0 0.0
        %1109 = vmatprep.subr.mxu0 0.0
        %1110 = vmatpush1.msra.mxu0 0.0
        %1111 = vmatprep.subr.mxu0 0.0
        %1112 = vmatpush1.msra.mxu0 0.0
        %1113 = vmatprep.subr.mxu0 0.0
        %1114 = vmatpush1.msra.mxu0 0.0
        %1115 = vmatprep.subr.mxu0 0.0
        %1116 = vmatpush1.msra.mxu0 0.0
        %1117 = vmatprep.subr.mxu0 0.0
        %1118 = vmatpush1.msra.mxu0 0.0
        %1119 = vmatprep.subr.mxu0 0.0
        %1120 = vmatpush1.msra.mxu0 0.0
        %1121 = vmatprep.subr.mxu0 0.0
        %1122 = vmatpush1.msra.mxu0 0.0
        %1123 = vmatprep.subr.mxu0 0.0
        %1124 = vmatpush1.msra.mxu0 0.0
        %1125 = vmatprep.subr.mxu0 0.0
        %1126 = vmatpush1.msra.mxu0 0.0
        %1127 = vmatprep.subr.mxu0 0.0
        %1128 = vmatpush1.msra.mxu0 0.0
        %1129 = vmatprep.subr.mxu0 0.0
        %1130 = vmatpush1.msra.mxu0 0.0
        %1131 = vmatprep.subr.mxu0 0.0
        %1132 = vmatpush1.msra.mxu0 0.0
        %1133 = vmatprep.subr.mxu0 0.0
        %1134 = vmatpush1.msra.mxu0 %v1009
        %1135 = vmatprep.subr.mxu0 0.0
        %1136 = vmatpush1.msra.mxu0 %v1004
        %1137 = vmatprep.subr.mxu0 0.0
        %1138 = vmatpush2.msra.mxu0 0.0
        %1139 = vmatprep.subr.mxu0 0.0
        %1140 = vmatpush2.msra.mxu0 0.0
        %1141 = vmatprep.subr.mxu0 0.0
        %1142 = vmatpush2.msra.mxu0 0.0
        %1143 = vmatprep.subr.mxu0 0.0
        %1144 = vmatpush2.msra.mxu0 0.0
        %1145 = vmatprep.subr.mxu0 0.0
        %1146 = vmatpush2.msra.mxu0 0.0
        %1147 = vmatprep.subr.mxu0 0.0
        %1148 = vmatpush2.msra.mxu0 0.0
        %1149 = vmatprep.subr.mxu0 0.0
        %1150 = vmatpush2.msra.mxu0 0.0
        %1151 = vmatprep.subr.mxu0 0.0
        %1152 = vmatpush2.msra.mxu0 0.0
        %1153 = vmatprep.subr.mxu0 0.0
        %1154 = vmatpush2.msra.mxu0 0.0
        %1155 = vmatprep.subr.mxu0 0.0
        %1156 = vmatpush2.msra.mxu0 0.0
        %1157 = vmatprep.subr.mxu0 0.0
        %1158 = vmatpush2.msra.mxu0 0.0
        %1159 = vmatprep.subr.mxu0 0.0
        %1160 = vmatpush2.msra.mxu0 0.0
        %1161 = vmatprep.subr.mxu0 0.0
        %1162 = vmatpush2.msra.mxu0 0.0
        %1163 = vmatprep.subr.mxu0 0.0
        %1164 = vmatpush2.msra.mxu0 0.0
        %1165 = vmatprep.subr.mxu0 0.0
        %1166 = vmatpush2.msra.mxu0 0.0
        %1167 = vmatprep.subr.mxu0 0.0
        %1168 = vmatpush2.msra.mxu0 0.0
        %1169 = vmatprep.mubr.f32.mxu0 0.0
        %1170 = vmatmul.mubr.f32.gmra.mxu0 %v1100
        %v1171 = vpop.f32.mrf.mxu0
        %v1172 = vadd.f32 %v1091, %v1171
        %v1173 = vpop.f32.mrf.mxu0
        %1174 = vmatprep.mubr.f32.mxu0 0.0
        %1175 = vmatmul.mubr.f32.gmra.mxu0 %v1103
        %v1176 = vpop.f32.mrf.mxu0
        %v1177 = vadd.f32 %v1096, %v1176
        %v1178 = vpop.f32.mrf.mxu0
        %1179 = vdwg.mxu0
        %s1180 = scalar_lea.vmem [#allocation13], 16
        %v1181 = vld [vmem:[%s1180] sm:$0xff]
        %v1182 = vld [vmem:[%s1180 + $0x8] sm:$0xff]
        %v1183 = vadd.f32 %v1172, %v1181
        %v1184 = vadd.f32 %v1177, %v1182
        %s1185 = scalar_lea.vmem [#allocation10], 16
        %v1186 = vld [vmem:[%s1185] sm:$0xff]
        %v1187 = vld [vmem:[%s1185 + $0x8] sm:$0xff]
        %s1188 = scalar_lea.vmem [#allocation11], 16
        %v1189 = vld [vmem:[%s1188] sm:$0xff]
        %v1190 = vld [vmem:[%s1188 + $0x8] sm:$0xff]
        %v1192 = vsel %vm569, %v1189, 0
        %v1195 = vsel %vm569, %v1190, 0
        %1197 = vmatprep.subr.mxu0 0.0
        %1198 = vmatpush1.msra.mxu0 0.0
        %1199 = vmatprep.subr.mxu0 0.0
        %1200 = vmatpush1.msra.mxu0 0.0
        %1201 = vmatprep.subr.mxu0 0.0
        %1202 = vmatpush1.msra.mxu0 0.0
        %1203 = vmatprep.subr.mxu0 0.0
        %1204 = vmatpush1.msra.mxu0 0.0
        %1205 = vmatprep.subr.mxu0 0.0
        %1206 = vmatpush1.msra.mxu0 0.0
        %1207 = vmatprep.subr.mxu0 0.0
        %1208 = vmatpush1.msra.mxu0 0.0
        %1209 = vmatprep.subr.mxu0 0.0
        %1210 = vmatpush1.msra.mxu0 0.0
        %1211 = vmatprep.subr.mxu0 0.0
        %1212 = vmatpush1.msra.mxu0 0.0
        %1213 = vmatprep.subr.mxu0 0.0
        %1214 = vmatpush1.msra.mxu0 0.0
        %1215 = vmatprep.subr.mxu0 0.0
        %1216 = vmatpush1.msra.mxu0 0.0
        %1217 = vmatprep.subr.mxu0 0.0
        %1218 = vmatpush1.msra.mxu0 0.0
        %1219 = vmatprep.subr.mxu0 0.0
        %1220 = vmatpush1.msra.mxu0 0.0
        %1221 = vmatprep.subr.mxu0 0.0
        %1222 = vmatpush1.msra.mxu0 0.0
        %1223 = vmatprep.subr.mxu0 0.0
        %1224 = vmatpush1.msra.mxu0 0.0
        %1225 = vmatprep.subr.mxu0 0.0
        %1226 = vmatpush1.msra.mxu0 %v919
        %1227 = vmatprep.subr.mxu0 0.0
        %1228 = vmatpush1.msra.mxu0 %v918
        %1229 = vmatprep.subr.mxu0 0.0
        %1230 = vmatpush2.msra.mxu0 0.0
        %1231 = vmatprep.subr.mxu0 0.0
        %1232 = vmatpush2.msra.mxu0 0.0
        %1233 = vmatprep.subr.mxu0 0.0
        %1234 = vmatpush2.msra.mxu0 0.0
        %1235 = vmatprep.subr.mxu0 0.0
        %1236 = vmatpush2.msra.mxu0 0.0
        %1237 = vmatprep.subr.mxu0 0.0
        %1238 = vmatpush2.msra.mxu0 0.0
        %1239 = vmatprep.subr.mxu0 0.0
        %1240 = vmatpush2.msra.mxu0 0.0
        %1241 = vmatprep.subr.mxu0 0.0
        %1242 = vmatpush2.msra.mxu0 0.0
        %1243 = vmatprep.subr.mxu0 0.0
        %1244 = vmatpush2.msra.mxu0 0.0
        %1245 = vmatprep.subr.mxu0 0.0
        %1246 = vmatpush2.msra.mxu0 0.0
        %1247 = vmatprep.subr.mxu0 0.0
        %1248 = vmatpush2.msra.mxu0 0.0
        %1249 = vmatprep.subr.mxu0 0.0
        %1250 = vmatpush2.msra.mxu0 0.0
        %1251 = vmatprep.subr.mxu0 0.0
        %1252 = vmatpush2.msra.mxu0 0.0
        %1253 = vmatprep.subr.mxu0 0.0
        %1254 = vmatpush2.msra.mxu0 0.0
        %1255 = vmatprep.subr.mxu0 0.0
        %1256 = vmatpush2.msra.mxu0 0.0
        %1257 = vmatprep.subr.mxu0 0.0
        %1258 = vmatpush2.msra.mxu0 0.0
        %1259 = vmatprep.subr.mxu0 0.0
        %1260 = vmatpush2.msra.mxu0 0.0
        %1261 = vmatprep.mubr.f32.mxu0 0.0
        %1262 = vmatmul.mubr.f32.gmra.mxu0 %v1192
        %v1263 = vpop.f32.mrf.mxu0
        %v1264 = vadd.f32 0.0, %v1263
        %v1265 = vpop.f32.mrf.mxu0
        %1266 = vmatprep.mubr.f32.mxu0 0.0
        %1267 = vmatmul.mubr.f32.gmra.mxu0 %v1195
        %v1268 = vpop.f32.mrf.mxu0
        %v1269 = vadd.f32 0.0, %v1268
        %v1270 = vpop.f32.mrf.mxu0
        %1271 = vdwg.mxu0
        %v1273 = vsel %vm569, %v1186, 0
        %v1276 = vsel %vm569, %v1187, 0
        %1278 = vmatprep.subr.mxu0 0.0
        %1279 = vmatpush1.msra.mxu0 0.0
        %1280 = vmatprep.subr.mxu0 0.0
        %1281 = vmatpush1.msra.mxu0 0.0
        %1282 = vmatprep.subr.mxu0 0.0
        %1283 = vmatpush1.msra.mxu0 0.0
        %1284 = vmatprep.subr.mxu0 0.0
        %1285 = vmatpush1.msra.mxu0 0.0
        %1286 = vmatprep.subr.mxu0 0.0
        %1287 = vmatpush1.msra.mxu0 0.0
        %1288 = vmatprep.subr.mxu0 0.0
        %1289 = vmatpush1.msra.mxu0 0.0
        %1290 = vmatprep.subr.mxu0 0.0
        %1291 = vmatpush1.msra.mxu0 0.0
        %1292 = vmatprep.subr.mxu0 0.0
        %1293 = vmatpush1.msra.mxu0 0.0
        %1294 = vmatprep.subr.mxu0 0.0
        %1295 = vmatpush1.msra.mxu0 0.0
        %1296 = vmatprep.subr.mxu0 0.0
        %1297 = vmatpush1.msra.mxu0 0.0
        %1298 = vmatprep.subr.mxu0 0.0
        %1299 = vmatpush1.msra.mxu0 0.0
        %1300 = vmatprep.subr.mxu0 0.0
        %1301 = vmatpush1.msra.mxu0 0.0
        %1302 = vmatprep.subr.mxu0 0.0
        %1303 = vmatpush1.msra.mxu0 0.0
        %1304 = vmatprep.subr.mxu0 0.0
        %1305 = vmatpush1.msra.mxu0 0.0
        %1306 = vmatprep.subr.mxu0 0.0
        %1307 = vmatpush1.msra.mxu0 %v1009
        %1308 = vmatprep.subr.mxu0 0.0
        %1309 = vmatpush1.msra.mxu0 %v1004
        %1310 = vmatprep.subr.mxu0 0.0
        %1311 = vmatpush2.msra.mxu0 0.0
        %1312 = vmatprep.subr.mxu0 0.0
        %1313 = vmatpush2.msra.mxu0 0.0
        %1314 = vmatprep.subr.mxu0 0.0
        %1315 = vmatpush2.msra.mxu0 0.0
        %1316 = vmatprep.subr.mxu0 0.0
        %1317 = vmatpush2.msra.mxu0 0.0
        %1318 = vmatprep.subr.mxu0 0.0
        %1319 = vmatpush2.msra.mxu0 0.0
        %1320 = vmatprep.subr.mxu0 0.0
        %1321 = vmatpush2.msra.mxu0 0.0
        %1322 = vmatprep.subr.mxu0 0.0
        %1323 = vmatpush2.msra.mxu0 0.0
        %1324 = vmatprep.subr.mxu0 0.0
        %1325 = vmatpush2.msra.mxu0 0.0
        %1326 = vmatprep.subr.mxu0 0.0
        %1327 = vmatpush2.msra.mxu0 0.0
        %1328 = vmatprep.subr.mxu0 0.0
        %1329 = vmatpush2.msra.mxu0 0.0
        %1330 = vmatprep.subr.mxu0 0.0
        %1331 = vmatpush2.msra.mxu0 0.0
        %1332 = vmatprep.subr.mxu0 0.0
        %1333 = vmatpush2.msra.mxu0 0.0
        %1334 = vmatprep.subr.mxu0 0.0
        %1335 = vmatpush2.msra.mxu0 0.0
        %1336 = vmatprep.subr.mxu0 0.0
        %1337 = vmatpush2.msra.mxu0 0.0
        %1338 = vmatprep.subr.mxu0 0.0
        %1339 = vmatpush2.msra.mxu0 0.0
        %1340 = vmatprep.subr.mxu0 0.0
        %1341 = vmatpush2.msra.mxu0 0.0
        %1342 = vmatprep.mubr.f32.mxu0 0.0
        %1343 = vmatmul.mubr.f32.gmra.mxu0 %v1273
        %v1344 = vpop.f32.mrf.mxu0
        %v1345 = vadd.f32 %v1264, %v1344
        %v1346 = vpop.f32.mrf.mxu0
        %1347 = vmatprep.mubr.f32.mxu0 0.0
        %1348 = vmatmul.mubr.f32.gmra.mxu0 %v1276
        %v1349 = vpop.f32.mrf.mxu0
        %v1350 = vadd.f32 %v1269, %v1349
        %v1351 = vpop.f32.mrf.mxu0
        %1352 = vdwg.mxu0
        %s1353 = scalar_lea.vmem [#allocation14], 16
        %v1354 = vld [vmem:[%s1353] sm:$0xff]
        %v1355 = vld [vmem:[%s1353 + $0x8] sm:$0xff]
        %v1356 = vadd.f32 %v1345, %v1354
        %v1357 = vadd.f32 %v1350, %v1355
        %v1358 = vxor.u32 %v1356, 2147483648
        %v1359 = vxor.u32 %v1357, 2147483648
        %v1360 = vmul.f32 %v1358, 1.442695
        %v1361 = vpow.pop %v1360
        %v1362 = vmul.f32 %v1359, 1.442695
        %v1363 = vpow.pop %v1362
        %v1364 = vadd.f32 %v1361, 1.0
        %v1365 = vadd.f32 %v1363, 1.0
        %v1366 = vrcp.pop %v1364
        %v1367 = vmul.f32 1.0, %v1366
        %v1368 = vrcp.pop %v1365
        %v1369 = vmul.f32 1.0, %v1368
        %v1370 = vmul.f32 %v1183, %v1367
        %v1371 = vmul.f32 %v1184, %v1369
        %s1372 = scalar_lea.vmem [#allocation5], 256
        %v1373 = vld [vmem:[%s1372] sm:$0xff]
        %v1374 = vld [vmem:[%s1372 + $0x8] sm:$0xff]
        %v1375 = vld [vmem:[%s1372 + $0x10] sm:$0xff]
        %v1376 = vld [vmem:[%s1372 + $0x18] sm:$0xff]
        %v1377 = vld [vmem:[%s1372 + $0x20] sm:$0xff]
        %v1378 = vld [vmem:[%s1372 + $0x28] sm:$0xff]
        %v1379 = vld [vmem:[%s1372 + $0x30] sm:$0xff]
        %v1380 = vld [vmem:[%s1372 + $0x38] sm:$0xff]
        %v1381 = vld [vmem:[%s1372 + $0x40] sm:$0xff]
        %v1382 = vld [vmem:[%s1372 + $0x48] sm:$0xff]
        %v1383 = vld [vmem:[%s1372 + $0x50] sm:$0xff]
        %v1384 = vld [vmem:[%s1372 + $0x58] sm:$0xff]
        %v1385 = vld [vmem:[%s1372 + $0x60] sm:$0xff]
        %v1386 = vld [vmem:[%s1372 + $0x68] sm:$0xff]
        %v1387 = vld [vmem:[%s1372 + $0x70] sm:$0xff]
        %v1388 = vld [vmem:[%s1372 + $0x78] sm:$0xff]
        %1389 = vmatprep.subr.mxu0 0.0
        %1390 = vmatpush1.msra.mxu0 %v1388
        %1391 = vmatprep.subr.mxu0 0.0
        %1392 = vmatpush1.msra.mxu0 %v1387
        %1393 = vmatprep.subr.mxu0 0.0
        %1394 = vmatpush1.msra.mxu0 %v1386
        %1395 = vmatprep.subr.mxu0 0.0
        %1396 = vmatpush1.msra.mxu0 %v1385
        %1397 = vmatprep.subr.mxu0 0.0
        %1398 = vmatpush1.msra.mxu0 %v1384
        %1399 = vmatprep.subr.mxu0 0.0
        %1400 = vmatpush1.msra.mxu0 %v1383
        %1401 = vmatprep.subr.mxu0 0.0
        %1402 = vmatpush1.msra.mxu0 %v1382
        %1403 = vmatprep.subr.mxu0 0.0
        %1404 = vmatpush1.msra.mxu0 %v1381
        %1405 = vmatprep.subr.mxu0 0.0
        %1406 = vmatpush1.msra.mxu0 %v1380
        %1407 = vmatprep.subr.mxu0 0.0
        %1408 = vmatpush1.msra.mxu0 %v1379
        %1409 = vmatprep.subr.mxu0 0.0
        %1410 = vmatpush1.msra.mxu0 %v1378
        %1411 = vmatprep.subr.mxu0 0.0
        %1412 = vmatpush1.msra.mxu0 %v1377
        %1413 = vmatprep.subr.mxu0 0.0
        %1414 = vmatpush1.msra.mxu0 %v1376
        %1415 = vmatprep.subr.mxu0 0.0
        %1416 = vmatpush1.msra.mxu0 %v1375
        %1417 = vmatprep.subr.mxu0 0.0
        %1418 = vmatpush1.msra.mxu0 %v1374
        %1419 = vmatprep.subr.mxu0 0.0
        %1420 = vmatpush1.msra.mxu0 %v1373
        %1421 = vmatprep.subr.mxu0 0.0
        %1422 = vmatpush2.msra.mxu0 0.0
        %1423 = vmatprep.subr.mxu0 0.0
        %1424 = vmatpush2.msra.mxu0 0.0
        %1425 = vmatprep.subr.mxu0 0.0
        %1426 = vmatpush2.msra.mxu0 0.0
        %1427 = vmatprep.subr.mxu0 0.0
        %1428 = vmatpush2.msra.mxu0 0.0
        %1429 = vmatprep.subr.mxu0 0.0
        %1430 = vmatpush2.msra.mxu0 0.0
        %1431 = vmatprep.subr.mxu0 0.0
        %1432 = vmatpush2.msra.mxu0 0.0
        %1433 = vmatprep.subr.mxu0 0.0
        %1434 = vmatpush2.msra.mxu0 0.0
        %1435 = vmatprep.subr.mxu0 0.0
        %1436 = vmatpush2.msra.mxu0 0.0
        %1437 = vmatprep.subr.mxu0 0.0
        %1438 = vmatpush2.msra.mxu0 0.0
        %1439 = vmatprep.subr.mxu0 0.0
        %1440 = vmatpush2.msra.mxu0 0.0
        %1441 = vmatprep.subr.mxu0 0.0
        %1442 = vmatpush2.msra.mxu0 0.0
        %1443 = vmatprep.subr.mxu0 0.0
        %1444 = vmatpush2.msra.mxu0 0.0
        %1445 = vmatprep.subr.mxu0 0.0
        %1446 = vmatpush2.msra.mxu0 0.0
        %1447 = vmatprep.subr.mxu0 0.0
        %1448 = vmatpush2.msra.mxu0 0.0
        %1449 = vmatprep.subr.mxu0 0.0
        %1450 = vmatpush2.msra.mxu0 0.0
        %1451 = vmatprep.subr.mxu0 0.0
        %1452 = vmatpush2.msra.mxu0 0.0
        %1453 = vmatprep.mubr.f32.mxu0 0.0
        %1454 = vmatmul.mubr.f32.gmra.mxu0 %v458
        %v1455 = vpop.f32.mrf.mxu0
        %v1456 = vadd.f32 0.0, %v1455
        %v1457 = vpop.f32.mrf.mxu0
        %1458 = vmatprep.mubr.f32.mxu0 0.0
        %1459 = vmatmul.mubr.f32.gmra.mxu0 %v459
        %v1460 = vpop.f32.mrf.mxu0
        %v1461 = vadd.f32 0.0, %v1460
        %v1462 = vpop.f32.mrf.mxu0
        %1463 = vdwg.mxu0
        %s1464 = scalar_lea.vmem [#allocation7], 32
        %v1465 = vld [vmem:[%s1464] sm:$0xff]
        %v1466 = vld [vmem:[%s1464 + $0x8] sm:$0xff]
        %s1467 = scalar_lea.vmem [#allocation8], 32
        %v1468 = vld [vmem:[%s1467] sm:$0xff]
        %v1469 = vld [vmem:[%s1467 + $0x8] sm:$0xff]
        %v1471 = vsel %vm569, %v1468, 0
        %v1474 = vsel %vm569, %v1469, 0
        %1476 = vmatprep.subr.mxu0 0.0
        %1477 = vmatpush1.msra.mxu0 0.0
        %1478 = vmatprep.subr.mxu0 0.0
        %1479 = vmatpush1.msra.mxu0 0.0
        %1480 = vmatprep.subr.mxu0 0.0
        %1481 = vmatpush1.msra.mxu0 0.0
        %1482 = vmatprep.subr.mxu0 0.0
        %1483 = vmatpush1.msra.mxu0 0.0
        %1484 = vmatprep.subr.mxu0 0.0
        %1485 = vmatpush1.msra.mxu0 0.0
        %1486 = vmatprep.subr.mxu0 0.0
        %1487 = vmatpush1.msra.mxu0 0.0
        %1488 = vmatprep.subr.mxu0 0.0
        %1489 = vmatpush1.msra.mxu0 0.0
        %1490 = vmatprep.subr.mxu0 0.0
        %1491 = vmatpush1.msra.mxu0 0.0
        %1492 = vmatprep.subr.mxu0 0.0
        %1493 = vmatpush1.msra.mxu0 0.0
        %1494 = vmatprep.subr.mxu0 0.0
        %1495 = vmatpush1.msra.mxu0 0.0
        %1496 = vmatprep.subr.mxu0 0.0
        %1497 = vmatpush1.msra.mxu0 0.0
        %1498 = vmatprep.subr.mxu0 0.0
        %1499 = vmatpush1.msra.mxu0 0.0
        %1500 = vmatprep.subr.mxu0 0.0
        %1501 = vmatpush1.msra.mxu0 0.0
        %1502 = vmatprep.subr.mxu0 0.0
        %1503 = vmatpush1.msra.mxu0 0.0
        %1504 = vmatprep.subr.mxu0 0.0
        %1505 = vmatpush1.msra.mxu0 %v459
        %1506 = vmatprep.subr.mxu0 0.0
        %1507 = vmatpush1.msra.mxu0 %v458
        %1508 = vmatprep.subr.mxu0 0.0
        %1509 = vmatpush2.msra.mxu0 0.0
        %1510 = vmatprep.subr.mxu0 0.0
        %1511 = vmatpush2.msra.mxu0 0.0
        %1512 = vmatprep.subr.mxu0 0.0
        %1513 = vmatpush2.msra.mxu0 0.0
        %1514 = vmatprep.subr.mxu0 0.0
        %1515 = vmatpush2.msra.mxu0 0.0
        %1516 = vmatprep.subr.mxu0 0.0
        %1517 = vmatpush2.msra.mxu0 0.0
        %1518 = vmatprep.subr.mxu0 0.0
        %1519 = vmatpush2.msra.mxu0 0.0
        %1520 = vmatprep.subr.mxu0 0.0
        %1521 = vmatpush2.msra.mxu0 0.0
        %1522 = vmatprep.subr.mxu0 0.0
        %1523 = vmatpush2.msra.mxu0 0.0
        %1524 = vmatprep.subr.mxu0 0.0
        %1525 = vmatpush2.msra.mxu0 0.0
        %1526 = vmatprep.subr.mxu0 0.0
        %1527 = vmatpush2.msra.mxu0 0.0
        %1528 = vmatprep.subr.mxu0 0.0
        %1529 = vmatpush2.msra.mxu0 0.0
        %1530 = vmatprep.subr.mxu0 0.0
        %1531 = vmatpush2.msra.mxu0 0.0
        %1532 = vmatprep.subr.mxu0 0.0
        %1533 = vmatpush2.msra.mxu0 0.0
        %1534 = vmatprep.subr.mxu0 0.0
        %1535 = vmatpush2.msra.mxu0 0.0
        %1536 = vmatprep.subr.mxu0 0.0
        %1537 = vmatpush2.msra.mxu0 0.0
        %1538 = vmatprep.subr.mxu0 0.0
        %1539 = vmatpush2.msra.mxu0 0.0
        %1540 = vmatprep.mubr.f32.mxu0 0.0
        %1541 = vmatmul.mubr.f32.gmra.mxu0 %v1471
        %v1542 = vpop.f32.mrf.mxu0
        %v1543 = vadd.f32 0.0, %v1542
        %v1544 = vpop.f32.mrf.mxu0
        %1545 = vmatprep.mubr.f32.mxu0 0.0
        %1546 = vmatmul.mubr.f32.gmra.mxu0 %v1474
        %v1547 = vpop.f32.mrf.mxu0
        %v1548 = vadd.f32 0.0, %v1547
        %v1549 = vpop.f32.mrf.mxu0
        %1550 = vdwg.mxu0
        %v1552 = vsel %vm569, %v1465, 0
        %v1555 = vsel %vm569, %v1466, 0
        %1557 = vmatprep.subr.mxu0 0.0
        %1558 = vmatpush1.msra.mxu0 0.0
        %1559 = vmatprep.subr.mxu0 0.0
        %1560 = vmatpush1.msra.mxu0 0.0
        %1561 = vmatprep.subr.mxu0 0.0
        %1562 = vmatpush1.msra.mxu0 0.0
        %1563 = vmatprep.subr.mxu0 0.0
        %1564 = vmatpush1.msra.mxu0 0.0
        %1565 = vmatprep.subr.mxu0 0.0
        %1566 = vmatpush1.msra.mxu0 0.0
        %1567 = vmatprep.subr.mxu0 0.0
        %1568 = vmatpush1.msra.mxu0 0.0
        %1569 = vmatprep.subr.mxu0 0.0
        %1570 = vmatpush1.msra.mxu0 0.0
        %1571 = vmatprep.subr.mxu0 0.0
        %1572 = vmatpush1.msra.mxu0 0.0
        %1573 = vmatprep.subr.mxu0 0.0
        %1574 = vmatpush1.msra.mxu0 0.0
        %1575 = vmatprep.subr.mxu0 0.0
        %1576 = vmatpush1.msra.mxu0 0.0
        %1577 = vmatprep.subr.mxu0 0.0
        %1578 = vmatpush1.msra.mxu0 0.0
        %1579 = vmatprep.subr.mxu0 0.0
        %1580 = vmatpush1.msra.mxu0 0.0
        %1581 = vmatprep.subr.mxu0 0.0
        %1582 = vmatpush1.msra.mxu0 0.0
        %1583 = vmatprep.subr.mxu0 0.0
        %1584 = vmatpush1.msra.mxu0 0.0
        %1585 = vmatprep.subr.mxu0 0.0
        %1586 = vmatpush1.msra.mxu0 %v1461
        %1587 = vmatprep.subr.mxu0 0.0
        %1588 = vmatpush1.msra.mxu0 %v1456
        %1589 = vmatprep.subr.mxu0 0.0
        %1590 = vmatpush2.msra.mxu0 0.0
        %1591 = vmatprep.subr.mxu0 0.0
        %1592 = vmatpush2.msra.mxu0 0.0
        %1593 = vmatprep.subr.mxu0 0.0
        %1594 = vmatpush2.msra.mxu0 0.0
        %1595 = vmatprep.subr.mxu0 0.0
        %1596 = vmatpush2.msra.mxu0 0.0
        %1597 = vmatprep.subr.mxu0 0.0
        %1598 = vmatpush2.msra.mxu0 0.0
        %1599 = vmatprep.subr.mxu0 0.0
        %1600 = vmatpush2.msra.mxu0 0.0
        %1601 = vmatprep.subr.mxu0 0.0
        %1602 = vmatpush2.msra.mxu0 0.0
        %1603 = vmatprep.subr.mxu0 0.0
        %1604 = vmatpush2.msra.mxu0 0.0
        %1605 = vmatprep.subr.mxu0 0.0
        %1606 = vmatpush2.msra.mxu0 0.0
        %1607 = vmatprep.subr.mxu0 0.0
        %1608 = vmatpush2.msra.mxu0 0.0
        %1609 = vmatprep.subr.mxu0 0.0
        %1610 = vmatpush2.msra.mxu0 0.0
        %1611 = vmatprep.subr.mxu0 0.0
        %1612 = vmatpush2.msra.mxu0 0.0
        %1613 = vmatprep.subr.mxu0 0.0
        %1614 = vmatpush2.msra.mxu0 0.0
        %1615 = vmatprep.subr.mxu0 0.0
        %1616 = vmatpush2.msra.mxu0 0.0
        %1617 = vmatprep.subr.mxu0 0.0
        %1618 = vmatpush2.msra.mxu0 0.0
        %1619 = vmatprep.subr.mxu0 0.0
        %1620 = vmatpush2.msra.mxu0 0.0
        %1621 = vmatprep.mubr.f32.mxu0 0.0
        %1622 = vmatmul.mubr.f32.gmra.mxu0 %v1552
        %v1623 = vpop.f32.mrf.mxu0
        %v1624 = vadd.f32 %v1543, %v1623
        %v1625 = vpop.f32.mrf.mxu0
        %1626 = vmatprep.mubr.f32.mxu0 0.0
        %1627 = vmatmul.mubr.f32.gmra.mxu0 %v1555
        %v1628 = vpop.f32.mrf.mxu0
        %v1629 = vadd.f32 %v1548, %v1628
        %v1630 = vpop.f32.mrf.mxu0
        %1631 = vdwg.mxu0
        %s1632 = scalar_lea.vmem [#allocation13], 32
        %v1633 = vld [vmem:[%s1632] sm:$0xff]
        %v1634 = vld [vmem:[%s1632 + $0x8] sm:$0xff]
        %v1635 = vadd.f32 %v1624, %v1633
        %v1636 = vadd.f32 %v1629, %v1634
        %s1637 = scalar_lea.vmem [#allocation10], 32
        %v1638 = vld [vmem:[%s1637] sm:$0xff]
        %v1639 = vld [vmem:[%s1637 + $0x8] sm:$0xff]
        %s1640 = scalar_lea.vmem [#allocation11], 32
        %v1641 = vld [vmem:[%s1640] sm:$0xff]
        %v1642 = vld [vmem:[%s1640 + $0x8] sm:$0xff]
        %v1644 = vsel %vm569, %v1641, 0
        %v1647 = vsel %vm569, %v1642, 0
        %1649 = vmatprep.subr.mxu0 0.0
        %1650 = vmatpush1.msra.mxu0 0.0
        %1651 = vmatprep.subr.mxu0 0.0
        %1652 = vmatpush1.msra.mxu0 0.0
        %1653 = vmatprep.subr.mxu0 0.0
        %1654 = vmatpush1.msra.mxu0 0.0
        %1655 = vmatprep.subr.mxu0 0.0
        %1656 = vmatpush1.msra.mxu0 0.0
        %1657 = vmatprep.subr.mxu0 0.0
        %1658 = vmatpush1.msra.mxu0 0.0
        %1659 = vmatprep.subr.mxu0 0.0
        %1660 = vmatpush1.msra.mxu0 0.0
        %1661 = vmatprep.subr.mxu0 0.0
        %1662 = vmatpush1.msra.mxu0 0.0
        %1663 = vmatprep.subr.mxu0 0.0
        %1664 = vmatpush1.msra.mxu0 0.0
        %1665 = vmatprep.subr.mxu0 0.0
        %1666 = vmatpush1.msra.mxu0 0.0
        %1667 = vmatprep.subr.mxu0 0.0
        %1668 = vmatpush1.msra.mxu0 0.0
        %1669 = vmatprep.subr.mxu0 0.0
        %1670 = vmatpush1.msra.mxu0 0.0
        %1671 = vmatprep.subr.mxu0 0.0
        %1672 = vmatpush1.msra.mxu0 0.0
        %1673 = vmatprep.subr.mxu0 0.0
        %1674 = vmatpush1.msra.mxu0 0.0
        %1675 = vmatprep.subr.mxu0 0.0
        %1676 = vmatpush1.msra.mxu0 0.0
        %1677 = vmatprep.subr.mxu0 0.0
        %1678 = vmatpush1.msra.mxu0 %v459
        %1679 = vmatprep.subr.mxu0 0.0
        %1680 = vmatpush1.msra.mxu0 %v458
        %1681 = vmatprep.subr.mxu0 0.0
        %1682 = vmatpush2.msra.mxu0 0.0
        %1683 = vmatprep.subr.mxu0 0.0
        %1684 = vmatpush2.msra.mxu0 0.0
        %1685 = vmatprep.subr.mxu0 0.0
        %1686 = vmatpush2.msra.mxu0 0.0
        %1687 = vmatprep.subr.mxu0 0.0
        %1688 = vmatpush2.msra.mxu0 0.0
        %1689 = vmatprep.subr.mxu0 0.0
        %1690 = vmatpush2.msra.mxu0 0.0
        %1691 = vmatprep.subr.mxu0 0.0
        %1692 = vmatpush2.msra.mxu0 0.0
        %1693 = vmatprep.subr.mxu0 0.0
        %1694 = vmatpush2.msra.mxu0 0.0
        %1695 = vmatprep.subr.mxu0 0.0
        %1696 = vmatpush2.msra.mxu0 0.0
        %1697 = vmatprep.subr.mxu0 0.0
        %1698 = vmatpush2.msra.mxu0 0.0
        %1699 = vmatprep.subr.mxu0 0.0
        %1700 = vmatpush2.msra.mxu0 0.0
        %1701 = vmatprep.subr.mxu0 0.0
        %1702 = vmatpush2.msra.mxu0 0.0
        %1703 = vmatprep.subr.mxu0 0.0
        %1704 = vmatpush2.msra.mxu0 0.0
        %1705 = vmatprep.subr.mxu0 0.0
        %1706 = vmatpush2.msra.mxu0 0.0
        %1707 = vmatprep.subr.mxu0 0.0
        %1708 = vmatpush2.msra.mxu0 0.0
        %1709 = vmatprep.subr.mxu0 0.0
        %1710 = vmatpush2.msra.mxu0 0.0
        %1711 = vmatprep.subr.mxu0 0.0
        %1712 = vmatpush2.msra.mxu0 0.0
        %1713 = vmatprep.mubr.f32.mxu0 0.0
        %1714 = vmatmul.mubr.f32.gmra.mxu0 %v1644
        %v1715 = vpop.f32.mrf.mxu0
        %v1716 = vadd.f32 0.0, %v1715
        %v1717 = vpop.f32.mrf.mxu0
        %1718 = vmatprep.mubr.f32.mxu0 0.0
        %1719 = vmatmul.mubr.f32.gmra.mxu0 %v1647
        %v1720 = vpop.f32.mrf.mxu0
        %v1721 = vadd.f32 0.0, %v1720
        %v1722 = vpop.f32.mrf.mxu0
        %1723 = vdwg.mxu0
        %v1725 = vsel %vm569, %v1638, 0
        %v1728 = vsel %vm569, %v1639, 0
        %1730 = vmatprep.subr.mxu0 0.0
        %1731 = vmatpush1.msra.mxu0 0.0
        %1732 = vmatprep.subr.mxu0 0.0
        %1733 = vmatpush1.msra.mxu0 0.0
        %1734 = vmatprep.subr.mxu0 0.0
        %1735 = vmatpush1.msra.mxu0 0.0
        %1736 = vmatprep.subr.mxu0 0.0
        %1737 = vmatpush1.msra.mxu0 0.0
        %1738 = vmatprep.subr.mxu0 0.0
        %1739 = vmatpush1.msra.mxu0 0.0
        %1740 = vmatprep.subr.mxu0 0.0
        %1741 = vmatpush1.msra.mxu0 0.0
        %1742 = vmatprep.subr.mxu0 0.0
        %1743 = vmatpush1.msra.mxu0 0.0
        %1744 = vmatprep.subr.mxu0 0.0
        %1745 = vmatpush1.msra.mxu0 0.0
        %1746 = vmatprep.subr.mxu0 0.0
        %1747 = vmatpush1.msra.mxu0 0.0
        %1748 = vmatprep.subr.mxu0 0.0
        %1749 = vmatpush1.msra.mxu0 0.0
        %1750 = vmatprep.subr.mxu0 0.0
        %1751 = vmatpush1.msra.mxu0 0.0
        %1752 = vmatprep.subr.mxu0 0.0
        %1753 = vmatpush1.msra.mxu0 0.0
        %1754 = vmatprep.subr.mxu0 0.0
        %1755 = vmatpush1.msra.mxu0 0.0
        %1756 = vmatprep.subr.mxu0 0.0
        %1757 = vmatpush1.msra.mxu0 0.0
        %1758 = vmatprep.subr.mxu0 0.0
        %1759 = vmatpush1.msra.mxu0 %v1461
        %1760 = vmatprep.subr.mxu0 0.0
        %1761 = vmatpush1.msra.mxu0 %v1456
        %1762 = vmatprep.subr.mxu0 0.0
        %1763 = vmatpush2.msra.mxu0 0.0
        %1764 = vmatprep.subr.mxu0 0.0
        %1765 = vmatpush2.msra.mxu0 0.0
        %1766 = vmatprep.subr.mxu0 0.0
        %1767 = vmatpush2.msra.mxu0 0.0
        %1768 = vmatprep.subr.mxu0 0.0
        %1769 = vmatpush2.msra.mxu0 0.0
        %1770 = vmatprep.subr.mxu0 0.0
        %1771 = vmatpush2.msra.mxu0 0.0
        %1772 = vmatprep.subr.mxu0 0.0
        %1773 = vmatpush2.msra.mxu0 0.0
        %1774 = vmatprep.subr.mxu0 0.0
        %1775 = vmatpush2.msra.mxu0 0.0
        %1776 = vmatprep.subr.mxu0 0.0
        %1777 = vmatpush2.msra.mxu0 0.0
        %1778 = vmatprep.subr.mxu0 0.0
        %1779 = vmatpush2.msra.mxu0 0.0
        %1780 = vmatprep.subr.mxu0 0.0
        %1781 = vmatpush2.msra.mxu0 0.0
        %1782 = vmatprep.subr.mxu0 0.0
        %1783 = vmatpush2.msra.mxu0 0.0
        %1784 = vmatprep.subr.mxu0 0.0
        %1785 = vmatpush2.msra.mxu0 0.0
        %1786 = vmatprep.subr.mxu0 0.0
        %1787 = vmatpush2.msra.mxu0 0.0
        %1788 = vmatprep.subr.mxu0 0.0
        %1789 = vmatpush2.msra.mxu0 0.0
        %1790 = vmatprep.subr.mxu0 0.0
        %1791 = vmatpush2.msra.mxu0 0.0
        %1792 = vmatprep.subr.mxu0 0.0
        %1793 = vmatpush2.msra.mxu0 0.0
        %1794 = vmatprep.mubr.f32.mxu0 0.0
        %1795 = vmatmul.mubr.f32.gmra.mxu0 %v1725
        %v1796 = vpop.f32.mrf.mxu0
        %v1797 = vadd.f32 %v1716, %v1796
        %v1798 = vpop.f32.mrf.mxu0
        %1799 = vmatprep.mubr.f32.mxu0 0.0
        %1800 = vmatmul.mubr.f32.gmra.mxu0 %v1728
        %v1801 = vpop.f32.mrf.mxu0
        %v1802 = vadd.f32 %v1721, %v1801
        %v1803 = vpop.f32.mrf.mxu0
        %1804 = vdwg.mxu0
        %s1805 = scalar_lea.vmem [#allocation14], 32
        %v1806 = vld [vmem:[%s1805] sm:$0xff]
        %v1807 = vld [vmem:[%s1805 + $0x8] sm:$0xff]
        %v1808 = vadd.f32 %v1797, %v1806
        %v1809 = vadd.f32 %v1802, %v1807
        %v1810 = vxor.u32 %v1808, 2147483648
        %v1811 = vxor.u32 %v1809, 2147483648
        %v1812 = vmul.f32 %v1810, 1.442695
        %v1813 = vpow.pop %v1812
        %v1814 = vmul.f32 %v1811, 1.442695
        %v1815 = vpow.pop %v1814
        %v1816 = vadd.f32 %v1813, 1.0
        %v1817 = vadd.f32 %v1815, 1.0
        %v1818 = vrcp.pop %v1816
        %v1819 = vmul.f32 1.0, %v1818
        %v1820 = vrcp.pop %v1817
        %v1821 = vmul.f32 1.0, %v1820
        %v1822 = vmul.f32 %v1635, %v1819
        %v1823 = vmul.f32 %v1636, %v1821
        %s1824 = scalar_lea.vmem [#allocation5], 384
        %v1825 = vld [vmem:[%s1824] sm:$0xff]
        %v1826 = vld [vmem:[%s1824 + $0x8] sm:$0xff]
        %v1827 = vld [vmem:[%s1824 + $0x10] sm:$0xff]
        %v1828 = vld [vmem:[%s1824 + $0x18] sm:$0xff]
        %v1829 = vld [vmem:[%s1824 + $0x20] sm:$0xff]
        %v1830 = vld [vmem:[%s1824 + $0x28] sm:$0xff]
        %v1831 = vld [vmem:[%s1824 + $0x30] sm:$0xff]
        %v1832 = vld [vmem:[%s1824 + $0x38] sm:$0xff]
        %v1833 = vld [vmem:[%s1824 + $0x40] sm:$0xff]
        %v1834 = vld [vmem:[%s1824 + $0x48] sm:$0xff]
        %v1835 = vld [vmem:[%s1824 + $0x50] sm:$0xff]
        %v1836 = vld [vmem:[%s1824 + $0x58] sm:$0xff]
        %v1837 = vld [vmem:[%s1824 + $0x60] sm:$0xff]
        %v1838 = vld [vmem:[%s1824 + $0x68] sm:$0xff]
        %v1839 = vld [vmem:[%s1824 + $0x70] sm:$0xff]
        %v1840 = vld [vmem:[%s1824 + $0x78] sm:$0xff]
        %1841 = vmatprep.subr.mxu0 0.0
        %1842 = vmatpush1.msra.mxu0 %v1840
        %1843 = vmatprep.subr.mxu0 0.0
        %1844 = vmatpush1.msra.mxu0 %v1839
        %1845 = vmatprep.subr.mxu0 0.0
        %1846 = vmatpush1.msra.mxu0 %v1838
        %1847 = vmatprep.subr.mxu0 0.0
        %1848 = vmatpush1.msra.mxu0 %v1837
        %1849 = vmatprep.subr.mxu0 0.0
        %1850 = vmatpush1.msra.mxu0 %v1836
        %1851 = vmatprep.subr.mxu0 0.0
        %1852 = vmatpush1.msra.mxu0 %v1835
        %1853 = vmatprep.subr.mxu0 0.0
        %1854 = vmatpush1.msra.mxu0 %v1834
        %1855 = vmatprep.subr.mxu0 0.0
        %1856 = vmatpush1.msra.mxu0 %v1833
        %1857 = vmatprep.subr.mxu0 0.0
        %1858 = vmatpush1.msra.mxu0 %v1832
        %1859 = vmatprep.subr.mxu0 0.0
        %1860 = vmatpush1.msra.mxu0 %v1831
        %1861 = vmatprep.subr.mxu0 0.0
        %1862 = vmatpush1.msra.mxu0 %v1830
        %1863 = vmatprep.subr.mxu0 0.0
        %1864 = vmatpush1.msra.mxu0 %v1829
        %1865 = vmatprep.subr.mxu0 0.0
        %1866 = vmatpush1.msra.mxu0 %v1828
        %1867 = vmatprep.subr.mxu0 0.0
        %1868 = vmatpush1.msra.mxu0 %v1827
        %1869 = vmatprep.subr.mxu0 0.0
        %1870 = vmatpush1.msra.mxu0 %v1826
        %1871 = vmatprep.subr.mxu0 0.0
        %1872 = vmatpush1.msra.mxu0 %v1825
        %1873 = vmatprep.subr.mxu0 0.0
        %1874 = vmatpush2.msra.mxu0 0.0
        %1875 = vmatprep.subr.mxu0 0.0
        %1876 = vmatpush2.msra.mxu0 0.0
        %1877 = vmatprep.subr.mxu0 0.0
        %1878 = vmatpush2.msra.mxu0 0.0
        %1879 = vmatprep.subr.mxu0 0.0
        %1880 = vmatpush2.msra.mxu0 0.0
        %1881 = vmatprep.subr.mxu0 0.0
        %1882 = vmatpush2.msra.mxu0 0.0
        %1883 = vmatprep.subr.mxu0 0.0
        %1884 = vmatpush2.msra.mxu0 0.0
        %1885 = vmatprep.subr.mxu0 0.0
        %1886 = vmatpush2.msra.mxu0 0.0
        %1887 = vmatprep.subr.mxu0 0.0
        %1888 = vmatpush2.msra.mxu0 0.0
        %1889 = vmatprep.subr.mxu0 0.0
        %1890 = vmatpush2.msra.mxu0 0.0
        %1891 = vmatprep.subr.mxu0 0.0
        %1892 = vmatpush2.msra.mxu0 0.0
        %1893 = vmatprep.subr.mxu0 0.0
        %1894 = vmatpush2.msra.mxu0 0.0
        %1895 = vmatprep.subr.mxu0 0.0
        %1896 = vmatpush2.msra.mxu0 0.0
        %1897 = vmatprep.subr.mxu0 0.0
        %1898 = vmatpush2.msra.mxu0 0.0
        %1899 = vmatprep.subr.mxu0 0.0
        %1900 = vmatpush2.msra.mxu0 0.0
        %1901 = vmatprep.subr.mxu0 0.0
        %1902 = vmatpush2.msra.mxu0 0.0
        %1903 = vmatprep.subr.mxu0 0.0
        %1904 = vmatpush2.msra.mxu0 0.0
        %1905 = vmatprep.mubr.f32.mxu0 0.0
        %1906 = vmatmul.mubr.f32.gmra.mxu0 %v1822
        %v1907 = vpop.f32.mrf.mxu0
        %v1908 = vadd.f32 0.0, %v1907
        %v1909 = vpop.f32.mrf.mxu0
        %1910 = vmatprep.mubr.f32.mxu0 0.0
        %1911 = vmatmul.mubr.f32.gmra.mxu0 %v1823
        %v1912 = vpop.f32.mrf.mxu0
        %v1913 = vadd.f32 0.0, %v1912
        %v1914 = vpop.f32.mrf.mxu0
        %1915 = vdwg.mxu0
        %s1916 = scalar_lea.vmem [#allocation7], 48
        %v1917 = vld [vmem:[%s1916] sm:$0xff]
        %v1918 = vld [vmem:[%s1916 + $0x8] sm:$0xff]
        %s1919 = scalar_lea.vmem [#allocation8], 48
        %v1920 = vld [vmem:[%s1919] sm:$0xff]
        %v1921 = vld [vmem:[%s1919 + $0x8] sm:$0xff]
        %v1923 = vsel %vm569, %v1920, 0
        %v1926 = vsel %vm569, %v1921, 0
        %1928 = vmatprep.subr.mxu0 0.0
        %1929 = vmatpush1.msra.mxu0 0.0
        %1930 = vmatprep.subr.mxu0 0.0
        %1931 = vmatpush1.msra.mxu0 0.0
        %1932 = vmatprep.subr.mxu0 0.0
        %1933 = vmatpush1.msra.mxu0 0.0
        %1934 = vmatprep.subr.mxu0 0.0
        %1935 = vmatpush1.msra.mxu0 0.0
        %1936 = vmatprep.subr.mxu0 0.0
        %1937 = vmatpush1.msra.mxu0 0.0
        %1938 = vmatprep.subr.mxu0 0.0
        %1939 = vmatpush1.msra.mxu0 0.0
        %1940 = vmatprep.subr.mxu0 0.0
        %1941 = vmatpush1.msra.mxu0 0.0
        %1942 = vmatprep.subr.mxu0 0.0
        %1943 = vmatpush1.msra.mxu0 0.0
        %1944 = vmatprep.subr.mxu0 0.0
        %1945 = vmatpush1.msra.mxu0 0.0
        %1946 = vmatprep.subr.mxu0 0.0
        %1947 = vmatpush1.msra.mxu0 0.0
        %1948 = vmatprep.subr.mxu0 0.0
        %1949 = vmatpush1.msra.mxu0 0.0
        %1950 = vmatprep.subr.mxu0 0.0
        %1951 = vmatpush1.msra.mxu0 0.0
        %1952 = vmatprep.subr.mxu0 0.0
        %1953 = vmatpush1.msra.mxu0 0.0
        %1954 = vmatprep.subr.mxu0 0.0
        %1955 = vmatpush1.msra.mxu0 0.0
        %1956 = vmatprep.subr.mxu0 0.0
        %1957 = vmatpush1.msra.mxu0 %v1823
        %1958 = vmatprep.subr.mxu0 0.0
        %1959 = vmatpush1.msra.mxu0 %v1822
        %1960 = vmatprep.subr.mxu0 0.0
        %1961 = vmatpush2.msra.mxu0 0.0
        %1962 = vmatprep.subr.mxu0 0.0
        %1963 = vmatpush2.msra.mxu0 0.0
        %1964 = vmatprep.subr.mxu0 0.0
        %1965 = vmatpush2.msra.mxu0 0.0
        %1966 = vmatprep.subr.mxu0 0.0
        %1967 = vmatpush2.msra.mxu0 0.0
        %1968 = vmatprep.subr.mxu0 0.0
        %1969 = vmatpush2.msra.mxu0 0.0
        %1970 = vmatprep.subr.mxu0 0.0
        %1971 = vmatpush2.msra.mxu0 0.0
        %1972 = vmatprep.subr.mxu0 0.0
        %1973 = vmatpush2.msra.mxu0 0.0
        %1974 = vmatprep.subr.mxu0 0.0
        %1975 = vmatpush2.msra.mxu0 0.0
        %1976 = vmatprep.subr.mxu0 0.0
        %1977 = vmatpush2.msra.mxu0 0.0
        %1978 = vmatprep.subr.mxu0 0.0
        %1979 = vmatpush2.msra.mxu0 0.0
        %1980 = vmatprep.subr.mxu0 0.0
        %1981 = vmatpush2.msra.mxu0 0.0
        %1982 = vmatprep.subr.mxu0 0.0
        %1983 = vmatpush2.msra.mxu0 0.0
        %1984 = vmatprep.subr.mxu0 0.0
        %1985 = vmatpush2.msra.mxu0 0.0
        %1986 = vmatprep.subr.mxu0 0.0
        %1987 = vmatpush2.msra.mxu0 0.0
        %1988 = vmatprep.subr.mxu0 0.0
        %1989 = vmatpush2.msra.mxu0 0.0
        %1990 = vmatprep.subr.mxu0 0.0
        %1991 = vmatpush2.msra.mxu0 0.0
        %1992 = vmatprep.mubr.f32.mxu0 0.0
        %1993 = vmatmul.mubr.f32.gmra.mxu0 %v1923
        %v1994 = vpop.f32.mrf.mxu0
        %v1995 = vadd.f32 0.0, %v1994
        %v1996 = vpop.f32.mrf.mxu0
        %1997 = vmatprep.mubr.f32.mxu0 0.0
        %1998 = vmatmul.mubr.f32.gmra.mxu0 %v1926
        %v1999 = vpop.f32.mrf.mxu0
        %v2000 = vadd.f32 0.0, %v1999
        %v2001 = vpop.f32.mrf.mxu0
        %2002 = vdwg.mxu0
        %v2004 = vsel %vm569, %v1917, 0
        %v2007 = vsel %vm569, %v1918, 0
        %2009 = vmatprep.subr.mxu0 0.0
        %2010 = vmatpush1.msra.mxu0 0.0
        %2011 = vmatprep.subr.mxu0 0.0
        %2012 = vmatpush1.msra.mxu0 0.0
        %2013 = vmatprep.subr.mxu0 0.0
        %2014 = vmatpush1.msra.mxu0 0.0
        %2015 = vmatprep.subr.mxu0 0.0
        %2016 = vmatpush1.msra.mxu0 0.0
        %2017 = vmatprep.subr.mxu0 0.0
        %2018 = vmatpush1.msra.mxu0 0.0
        %2019 = vmatprep.subr.mxu0 0.0
        %2020 = vmatpush1.msra.mxu0 0.0
        %2021 = vmatprep.subr.mxu0 0.0
        %2022 = vmatpush1.msra.mxu0 0.0
        %2023 = vmatprep.subr.mxu0 0.0
        %2024 = vmatpush1.msra.mxu0 0.0
        %2025 = vmatprep.subr.mxu0 0.0
        %2026 = vmatpush1.msra.mxu0 0.0
        %2027 = vmatprep.subr.mxu0 0.0
        %2028 = vmatpush1.msra.mxu0 0.0
        %2029 = vmatprep.subr.mxu0 0.0
        %2030 = vmatpush1.msra.mxu0 0.0
        %2031 = vmatprep.subr.mxu0 0.0
        %2032 = vmatpush1.msra.mxu0 0.0
        %2033 = vmatprep.subr.mxu0 0.0
        %2034 = vmatpush1.msra.mxu0 0.0
        %2035 = vmatprep.subr.mxu0 0.0
        %2036 = vmatpush1.msra.mxu0 0.0
        %2037 = vmatprep.subr.mxu0 0.0
        %2038 = vmatpush1.msra.mxu0 %v1913
        %2039 = vmatprep.subr.mxu0 0.0
        %2040 = vmatpush1.msra.mxu0 %v1908
        %2041 = vmatprep.subr.mxu0 0.0
        %2042 = vmatpush2.msra.mxu0 0.0
        %2043 = vmatprep.subr.mxu0 0.0
        %2044 = vmatpush2.msra.mxu0 0.0
        %2045 = vmatprep.subr.mxu0 0.0
        %2046 = vmatpush2.msra.mxu0 0.0
        %2047 = vmatprep.subr.mxu0 0.0
        %2048 = vmatpush2.msra.mxu0 0.0
        %2049 = vmatprep.subr.mxu0 0.0
        %2050 = vmatpush2.msra.mxu0 0.0
        %2051 = vmatprep.subr.mxu0 0.0
        %2052 = vmatpush2.msra.mxu0 0.0
        %2053 = vmatprep.subr.mxu0 0.0
        %2054 = vmatpush2.msra.mxu0 0.0
        %2055 = vmatprep.subr.mxu0 0.0
        %2056 = vmatpush2.msra.mxu0 0.0
        %2057 = vmatprep.subr.mxu0 0.0
        %2058 = vmatpush2.msra.mxu0 0.0
        %2059 = vmatprep.subr.mxu0 0.0
        %2060 = vmatpush2.msra.mxu0 0.0
        %2061 = vmatprep.subr.mxu0 0.0
        %2062 = vmatpush2.msra.mxu0 0.0
        %2063 = vmatprep.subr.mxu0 0.0
        %2064 = vmatpush2.msra.mxu0 0.0
        %2065 = vmatprep.subr.mxu0 0.0
        %2066 = vmatpush2.msra.mxu0 0.0
        %2067 = vmatprep.subr.mxu0 0.0
        %2068 = vmatpush2.msra.mxu0 0.0
        %2069 = vmatprep.subr.mxu0 0.0
        %2070 = vmatpush2.msra.mxu0 0.0
        %2071 = vmatprep.subr.mxu0 0.0
        %2072 = vmatpush2.msra.mxu0 0.0
        %2073 = vmatprep.mubr.f32.mxu0 0.0
        %2074 = vmatmul.mubr.f32.gmra.mxu0 %v2004
        %v2075 = vpop.f32.mrf.mxu0
        %v2076 = vadd.f32 %v1995, %v2075
        %v2077 = vpop.f32.mrf.mxu0
        %2078 = vmatprep.mubr.f32.mxu0 0.0
        %2079 = vmatmul.mubr.f32.gmra.mxu0 %v2007
        %v2080 = vpop.f32.mrf.mxu0
        %v2081 = vadd.f32 %v2000, %v2080
        %v2082 = vpop.f32.mrf.mxu0
        %2083 = vdwg.mxu0
        %s2084 = scalar_lea.vmem [#allocation13], 48
        %v2085 = vld [vmem:[%s2084] sm:$0xff]
        %v2086 = vld [vmem:[%s2084 + $0x8] sm:$0xff]
        %v2087 = vadd.f32 %v2076, %v2085
        %v2088 = vadd.f32 %v2081, %v2086
        %s2089 = scalar_lea.vmem [#allocation10], 48
        %v2090 = vld [vmem:[%s2089] sm:$0xff]
        %v2091 = vld [vmem:[%s2089 + $0x8] sm:$0xff]
        %s2092 = scalar_lea.vmem [#allocation11], 48
        %v2093 = vld [vmem:[%s2092] sm:$0xff]
        %v2094 = vld [vmem:[%s2092 + $0x8] sm:$0xff]
        %v2096 = vsel %vm569, %v2093, 0
        %v2099 = vsel %vm569, %v2094, 0
        %2101 = vmatprep.subr.mxu0 0.0
        %2102 = vmatpush1.msra.mxu0 0.0
        %2103 = vmatprep.subr.mxu0 0.0
        %2104 = vmatpush1.msra.mxu0 0.0
        %2105 = vmatprep.subr.mxu0 0.0
        %2106 = vmatpush1.msra.mxu0 0.0
        %2107 = vmatprep.subr.mxu0 0.0
        %2108 = vmatpush1.msra.mxu0 0.0
        %2109 = vmatprep.subr.mxu0 0.0
        %2110 = vmatpush1.msra.mxu0 0.0
        %2111 = vmatprep.subr.mxu0 0.0
        %2112 = vmatpush1.msra.mxu0 0.0
        %2113 = vmatprep.subr.mxu0 0.0
        %2114 = vmatpush1.msra.mxu0 0.0
        %2115 = vmatprep.subr.mxu0 0.0
        %2116 = vmatpush1.msra.mxu0 0.0
        %2117 = vmatprep.subr.mxu0 0.0
        %2118 = vmatpush1.msra.mxu0 0.0
        %2119 = vmatprep.subr.mxu0 0.0
        %2120 = vmatpush1.msra.mxu0 0.0
        %2121 = vmatprep.subr.mxu0 0.0
        %2122 = vmatpush1.msra.mxu0 0.0
        %2123 = vmatprep.subr.mxu0 0.0
        %2124 = vmatpush1.msra.mxu0 0.0
        %2125 = vmatprep.subr.mxu0 0.0
        %2126 = vmatpush1.msra.mxu0 0.0
        %2127 = vmatprep.subr.mxu0 0.0
        %2128 = vmatpush1.msra.mxu0 0.0
        %2129 = vmatprep.subr.mxu0 0.0
        %2130 = vmatpush1.msra.mxu0 %v1823
        %2131 = vmatprep.subr.mxu0 0.0
        %2132 = vmatpush1.msra.mxu0 %v1822
        %2133 = vmatprep.subr.mxu0 0.0
        %2134 = vmatpush2.msra.mxu0 0.0
        %2135 = vmatprep.subr.mxu0 0.0
        %2136 = vmatpush2.msra.mxu0 0.0
        %2137 = vmatprep.subr.mxu0 0.0
        %2138 = vmatpush2.msra.mxu0 0.0
        %2139 = vmatprep.subr.mxu0 0.0
        %2140 = vmatpush2.msra.mxu0 0.0
        %2141 = vmatprep.subr.mxu0 0.0
        %2142 = vmatpush2.msra.mxu0 0.0
        %2143 = vmatprep.subr.mxu0 0.0
        %2144 = vmatpush2.msra.mxu0 0.0
        %2145 = vmatprep.subr.mxu0 0.0
        %2146 = vmatpush2.msra.mxu0 0.0
        %2147 = vmatprep.subr.mxu0 0.0
        %2148 = vmatpush2.msra.mxu0 0.0
        %2149 = vmatprep.subr.mxu0 0.0
        %2150 = vmatpush2.msra.mxu0 0.0
        %2151 = vmatprep.subr.mxu0 0.0
        %2152 = vmatpush2.msra.mxu0 0.0
        %2153 = vmatprep.subr.mxu0 0.0
        %2154 = vmatpush2.msra.mxu0 0.0
        %2155 = vmatprep.subr.mxu0 0.0
        %2156 = vmatpush2.msra.mxu0 0.0
        %2157 = vmatprep.subr.mxu0 0.0
        %2158 = vmatpush2.msra.mxu0 0.0
        %2159 = vmatprep.subr.mxu0 0.0
        %2160 = vmatpush2.msra.mxu0 0.0
        %2161 = vmatprep.subr.mxu0 0.0
        %2162 = vmatpush2.msra.mxu0 0.0
        %2163 = vmatprep.subr.mxu0 0.0
        %2164 = vmatpush2.msra.mxu0 0.0
        %2165 = vmatprep.mubr.f32.mxu0 0.0
        %2166 = vmatmul.mubr.f32.gmra.mxu0 %v2096
        %v2167 = vpop.f32.mrf.mxu0
        %v2168 = vadd.f32 0.0, %v2167
        %v2169 = vpop.f32.mrf.mxu0
        %2170 = vmatprep.mubr.f32.mxu0 0.0
        %2171 = vmatmul.mubr.f32.gmra.mxu0 %v2099
        %v2172 = vpop.f32.mrf.mxu0
        %v2173 = vadd.f32 0.0, %v2172
        %v2174 = vpop.f32.mrf.mxu0
        %2175 = vdwg.mxu0
        %v2177 = vsel %vm569, %v2090, 0
        %v2180 = vsel %vm569, %v2091, 0
        %2182 = vmatprep.subr.mxu0 0.0
        %2183 = vmatpush1.msra.mxu0 0.0
        %2184 = vmatprep.subr.mxu0 0.0
        %2185 = vmatpush1.msra.mxu0 0.0
        %2186 = vmatprep.subr.mxu0 0.0
        %2187 = vmatpush1.msra.mxu0 0.0
        %2188 = vmatprep.subr.mxu0 0.0
        %2189 = vmatpush1.msra.mxu0 0.0
        %2190 = vmatprep.subr.mxu0 0.0
        %2191 = vmatpush1.msra.mxu0 0.0
        %2192 = vmatprep.subr.mxu0 0.0
        %2193 = vmatpush1.msra.mxu0 0.0
        %2194 = vmatprep.subr.mxu0 0.0
        %2195 = vmatpush1.msra.mxu0 0.0
        %2196 = vmatprep.subr.mxu0 0.0
        %2197 = vmatpush1.msra.mxu0 0.0
        %2198 = vmatprep.subr.mxu0 0.0
        %2199 = vmatpush1.msra.mxu0 0.0
        %2200 = vmatprep.subr.mxu0 0.0
        %2201 = vmatpush1.msra.mxu0 0.0
        %2202 = vmatprep.subr.mxu0 0.0
        %2203 = vmatpush1.msra.mxu0 0.0
        %2204 = vmatprep.subr.mxu0 0.0
        %2205 = vmatpush1.msra.mxu0 0.0
        %2206 = vmatprep.subr.mxu0 0.0
        %2207 = vmatpush1.msra.mxu0 0.0
        %2208 = vmatprep.subr.mxu0 0.0
        %2209 = vmatpush1.msra.mxu0 0.0
        %2210 = vmatprep.subr.mxu0 0.0
        %2211 = vmatpush1.msra.mxu0 %v1913
        %2212 = vmatprep.subr.mxu0 0.0
        %2213 = vmatpush1.msra.mxu0 %v1908
        %2214 = vmatprep.subr.mxu0 0.0
        %2215 = vmatpush2.msra.mxu0 0.0
        %2216 = vmatprep.subr.mxu0 0.0
        %2217 = vmatpush2.msra.mxu0 0.0
        %2218 = vmatprep.subr.mxu0 0.0
        %2219 = vmatpush2.msra.mxu0 0.0
        %2220 = vmatprep.subr.mxu0 0.0
        %2221 = vmatpush2.msra.mxu0 0.0
        %2222 = vmatprep.subr.mxu0 0.0
        %2223 = vmatpush2.msra.mxu0 0.0
        %2224 = vmatprep.subr.mxu0 0.0
        %2225 = vmatpush2.msra.mxu0 0.0
        %2226 = vmatprep.subr.mxu0 0.0
        %2227 = vmatpush2.msra.mxu0 0.0
        %2228 = vmatprep.subr.mxu0 0.0
        %2229 = vmatpush2.msra.mxu0 0.0
        %2230 = vmatprep.subr.mxu0 0.0
        %2231 = vmatpush2.msra.mxu0 0.0
        %2232 = vmatprep.subr.mxu0 0.0
        %2233 = vmatpush2.msra.mxu0 0.0
        %2234 = vmatprep.subr.mxu0 0.0
        %2235 = vmatpush2.msra.mxu0 0.0
        %2236 = vmatprep.subr.mxu0 0.0
        %2237 = vmatpush2.msra.mxu0 0.0
        %2238 = vmatprep.subr.mxu0 0.0
        %2239 = vmatpush2.msra.mxu0 0.0
        %2240 = vmatprep.subr.mxu0 0.0
        %2241 = vmatpush2.msra.mxu0 0.0
        %2242 = vmatprep.subr.mxu0 0.0
        %2243 = vmatpush2.msra.mxu0 0.0
        %2244 = vmatprep.subr.mxu0 0.0
        %2245 = vmatpush2.msra.mxu0 0.0
        %2246 = vmatprep.mubr.f32.mxu0 0.0
        %2247 = vmatmul.mubr.f32.gmra.mxu0 %v2177
        %v2248 = vpop.f32.mrf.mxu0
        %v2249 = vadd.f32 %v2168, %v2248
        %v2250 = vpop.f32.mrf.mxu0
        %2251 = vmatprep.mubr.f32.mxu0 0.0
        %2252 = vmatmul.mubr.f32.gmra.mxu0 %v2180
        %v2253 = vpop.f32.mrf.mxu0
        %v2254 = vadd.f32 %v2173, %v2253
        %v2255 = vpop.f32.mrf.mxu0
        %2256 = vdwg.mxu0
        %s2257 = scalar_lea.vmem [#allocation14], 48
        %v2258 = vld [vmem:[%s2257] sm:$0xff]
        %v2259 = vld [vmem:[%s2257 + $0x8] sm:$0xff]
        %v2260 = vadd.f32 %v2249, %v2258
        %v2261 = vadd.f32 %v2254, %v2259
        %v2262 = vxor.u32 %v2260, 2147483648
        %v2263 = vxor.u32 %v2261, 2147483648
        %v2264 = vmul.f32 %v2262, 1.442695
        %v2265 = vpow.pop %v2264
        %v2266 = vmul.f32 %v2263, 1.442695
        %v2267 = vpow.pop %v2266
        %v2268 = vadd.f32 %v2265, 1.0
        %v2269 = vadd.f32 %v2267, 1.0
        %v2270 = vrcp.pop %v2268
        %v2271 = vmul.f32 1.0, %v2270
        %v2272 = vrcp.pop %v2269
        %v2273 = vmul.f32 1.0, %v2272
        %v2274 = vmul.f32 %v2087, %v2271
        %v2275 = vmul.f32 %v2088, %v2273
        %v2276 = vmax.f32 %v1370, %v2274
        %v2277 = vmax.f32 %v1371, %v2275
        %2278 = vxpose.xlu0.b32.start [1/16] %v2276, 128
        %2279 = vxpose.xlu0.b32.cont [2/16] %v2277, 128
        %2280 = vxpose.xlu0.b32.cont [3/16] 0.0, 128
        %2281 = vxpose.xlu0.b32.cont [4/16] 0.0, 128
        %2282 = vxpose.xlu0.b32.cont [5/16] 0.0, 128
        %2283 = vxpose.xlu0.b32.cont [6/16] 0.0, 128
        %2284 = vxpose.xlu0.b32.cont [7/16] 0.0, 128
        %2285 = vxpose.xlu0.b32.cont [8/16] 0.0, 128
        %2286 = vxpose.xlu0.b32.cont [9/16] 0.0, 128
        %2287 = vxpose.xlu0.b32.cont [10/16] 0.0, 128
        %2288 = vxpose.xlu0.b32.cont [11/16] 0.0, 128
        %2289 = vxpose.xlu0.b32.cont [12/16] 0.0, 128
        %2290 = vxpose.xlu0.b32.cont [13/16] 0.0, 128
        %2291 = vxpose.xlu0.b32.cont [14/16] 0.0, 128
        %2292 = vxpose.xlu0.b32.cont [15/16] 0.0, 128
        %2293 = vxpose.xlu0.b32.end [16/16] 0.0, 128
        %v2294 = vpop.trf.xlu0
        %v2295 = vpop.trf.xlu0
        %v2296 = vpop.trf.xlu0
        %v2297 = vpop.trf.xlu0
        %v2298 = vpop.trf.xlu0
        %v2299 = vpop.trf.xlu0
        %v2300 = vpop.trf.xlu0
        %v2301 = vpop.trf.xlu0
        %v2302 = vpop.trf.xlu0
        %v2303 = vpop.trf.xlu0
        %v2304 = vpop.trf.xlu0
        %v2305 = vpop.trf.xlu0
        %v2306 = vpop.trf.xlu0
        %v2307 = vpop.trf.xlu0
        %v2308 = vpop.trf.xlu0
        %v2309 = vpop.trf.xlu0
        %2310 = vst.msk [vmem:[%s425] sm:$0xff] %vm569, %v2294
        %2311 = vst.msk [vmem:[%s425 + $0x8] sm:$0xff] %vm569, %v2295
        %2312 = vst.msk [vmem:[%s425 + $0x10] sm:$0xff] %vm569, %v2296
        %2313 = vst.msk [vmem:[%s425 + $0x18] sm:$0xff] %vm569, %v2297
        %2314 = vst.msk [vmem:[%s425 + $0x20] sm:$0xff] %vm569, %v2298
        %2315 = vst.msk [vmem:[%s425 + $0x28] sm:$0xff] %vm569, %v2299
        %2316 = vst.msk [vmem:[%s425 + $0x30] sm:$0xff] %vm569, %v2300
        %2317 = vst.msk [vmem:[%s425 + $0x38] sm:$0xff] %vm569, %v2301
        %2318 = vst.msk [vmem:[%s425 + $0x40] sm:$0xff] %vm569, %v2302
        %2319 = vst.msk [vmem:[%s425 + $0x48] sm:$0xff] %vm569, %v2303
        %2320 = vst.msk [vmem:[%s425 + $0x50] sm:$0xff] %vm569, %v2304
        %2321 = vst.msk [vmem:[%s425 + $0x58] sm:$0xff] %vm569, %v2305
        %2322 = vst.msk [vmem:[%s425 + $0x60] sm:$0xff] %vm569, %v2306
        %2323 = vst.msk [vmem:[%s425 + $0x68] sm:$0xff] %vm569, %v2307
        %2324 = vst.msk [vmem:[%s425 + $0x70] sm:$0xff] %vm569, %v2308
        %2325 = vst.msk [vmem:[%s425 + $0x78] sm:$0xff] %vm569, %v2309
        %s2326 = sand.u32 %s210, 1
        %s2327 = scalar_lea.sflag [#allocation4], %s2326
        %s2328 = sand.u32 %s210, 1
        %s2329 = smul.addr %s2328, 128
        %s2330 = scalar_lea.vmem [#allocation16], %s2329
        // Predicated region
        $region85: #{stgsa_layer_forward.1} parent=51 // pred_check
          %p2331 = pneg %p220
        $region86: #{stgsa_layer_forward.1} parent=51 // pred_check_branch
          %2333 = sbr.rel (%p2331) target = $region88
        $region87: #{stgsa_layer_forward.1} parent=51 // pred_region
          %s2335 = ssub.s32 2048, 2048
          %2336 = vsyncadd %s2327, %s2335
          %s2337 = smul.addr %s29, 16
          %s2338 = smul.addr %s2337, 128
          %s2339 = scalar_lea.hbm %s8, %s2338
          %s2340 = sshll.u32 %s2330, 4
          %s2341 = int_to_ptr.vmem [resolvable:$true] %s2340
          %2346 = dma.vmem_to_hbm [thread:$0]  %s2341, 2048, %s2339, %s2327, 128, 128, 8
        $region88: #{stgsa_layer_forward.1} parent=51 // pred_fallthru
          _
      $region52: #{stgsa_layer_forward.1} parent=5 // pred_fallthru
        _
      %p2347 = scmp.le.s32.totalorder 2, %s24
      // Predicated region
      $region89: #{stgsa_layer_forward.1} parent=5 // pred_check
        %p2348 = pneg %p2347
      $region90: #{stgsa_layer_forward.1} parent=5 // pred_check_branch
        %2350 = sbr.rel (%p2348) target = $region92
      $region91: #{stgsa_layer_forward.1} parent=5 // pred_region
        %s2351 = ssub.s32 %s24, 2
        // Predicated region
        $region93: #{stgsa_layer_forward.1} parent=91 // pred_check
          %p2352 = pneg %p226
        $region94: #{stgsa_layer_forward.1} parent=91 // pred_check_branch
          %2354 = sbr.rel (%p2352) target = $region96
        $region95: #{stgsa_layer_forward.1} parent=91 // pred_region
          %s2355 = sand.u32 %s211, 1
          %s2356 = scalar_lea.sflag [#allocation4], %s2355
          %s2357 = sand.u32 %s211, 1
          %s2358 = smul.addr %s2357, 128
          %s2359 = scalar_lea.vmem [#allocation16], %s2358
          %2360 = dma.done %s2356, 2048
        $region96: #{stgsa_layer_forward.1} parent=91 // pred_fallthru
          _
      $region92: #{stgsa_layer_forward.1} parent=5 // pred_fallthru
        _
    $region6: #{stgsa_layer_forward.1} parent=1 // loop_footer
      %s28 = sadd.s32 1, %s24
    $region7: #{stgsa_layer_forward.1} parent=1 // loop_footer_branch
      %23 = sbr.rel target = $region3
    $region8: #{stgsa_layer_forward.1} parent=1 // loop_exit
      _
    %2361 = vsyncpa [#allocation3], 1
    %s2362 = scalar_lea.sflag [#allocation3], 1
    %2363 = vsyncpa %s2362, 1
    %2364 = vsyncpa [#allocation6], 1
    %2365 = vsyncpa [#allocation9], 1
    %2366 = vsyncpa [#allocation12], 1
    %2367 = vsyncpa [#allocation15], 1
    %2368 = vsyncpa [#allocation4], 1
    %s2369 = scalar_lea.sflag [#allocation4], 1
    %2370 = vsyncpa %s2369, 1

</llo_original>
